<compile_context>
chip_gen: v6e
topology: v6e:2x2x1
jax: 0.10.0
libtpu: 0.0.40
codegen_flags: <defaults>
</compile_context>

<pallas_src>
import functools

import jax
import jax.numpy as jnp
from jax.experimental import pallas as pl
from jax.experimental.pallas import tpu as pltpu

# ----------------------------- configuration -----------------------------
NUM_CLASSES = 10
CNN_FEAT = 64                      # cnn_model.fc.in_features
SWIN_FEAT = 64                     # swin_model.fc.in_features
PROJ = CNN_FEAT + SWIN_FEAT        # 128 -> lane-dense combined width
HIDDEN = 512                       # fc1 output
OUT_PAD = 128                      # lane-dense padded logits width
DROP_P = 0.5
BATCH_TILE = 8                     # f32 sublane minimum


def _choose_spatial_tile(s, bt, c, elem_bytes=2, target_block_bytes=256 * 1024):
    """Largest multiple-of-128 divisor of `s` whose (bt, c, tile) bf16 block stays
    under target_block_bytes (keeps double-buffered activation streams small
    enough for v7x's 64 MiB VMEM while staying >=512 lanes wide when possible).
    Falls back to the full spatial dim, which is always a legal block."""
    if s % 128 != 0:
        return s
    per_col = max(1, bt * c * elem_bytes)
    max_cols = max(128, (target_block_bytes // per_col) // 128 * 128)
    tile = min(s, max_cols)
    while tile >= 128:
        if s % tile == 0:
            return tile
        tile -= 128
    return s


# ------------------------------- kernel ----------------------------------
def hybrid_kernel(xc_ref, xs_ref,                 # activations (bf16 tiles)
                  wpc_ref, wps_ref, bp_ref,       # fused branch projections
                  w1_ref, b1_ref, w2_ref, b2_ref,  # MLP head (w2/b2 lane-padded)
                  drop_ref,                       # dropout multiplier (BT, HIDDEN)
                  out_ref,                        # (BT, OUT_PAD) f32
                  pool_acc):                      # VMEM scratch (BT, C) f32
    s = pl.program_id(1)
    n_s = pl.num_programs(1)

    @pl.when(s == 0)
    def _init():
        pool_acc[...] = jnp.zeros_like(pool_acc)

    # Running sum of the 3D volume over the tiled spatial axis (f32 accumulate).
    # The 1/S mean scale is folded into wpc, so a plain sum suffices.
    pool_acc[...] += jnp.sum(xc_ref[...].astype(jnp.float32), axis=-1)

    @pl.when(s == n_s - 1)
    def _finalize():
        cnn_pool = pool_acc[...]                                        # (BT, C)
        swin_pool = jnp.sum(xs_ref[...].astype(jnp.float32), axis=-1)   # (BT, C)

        # Fused branch projections: block-structured weights produce the
        # concatenated (BT, 128) "combined" tensor directly (no concat).
        combined = (
            jnp.dot(cnn_pool, wpc_ref[...], preferred_element_type=jnp.float32)
            + jnp.dot(swin_pool, wps_ref[...], preferred_element_type=jnp.float32)
            + bp_ref[...])
        combined = jnp.maximum(combined, 0.0)                           # (BT, 128)

        # fc1 + ReLU
        h = jnp.dot(combined, w1_ref[...],
                    preferred_element_type=jnp.float32) + b1_ref[...]
        h = jnp.maximum(h, 0.0)                                         # (BT, 512)

        # Dropout(0.5): multiplier is {0, 1/(1-p)} in training, all-ones in eval
        # (exact identity in f32), generated wrapper-side.
        h = h * drop_ref[...]

        # fc2 into lane-dense padded logits.
        out = jnp.dot(h, w2_ref[...],
                      preferred_element_type=jnp.float32) + b2_ref[...]
        out_ref[...] = out.astype(out_ref.dtype)


# ------------------------------- wrapper ----------------------------------
def hybrid_forward(x_cnn, x_swin, params, *, training=False, seed=0):
    """x_cnn: (B, C, D, H, W) float32, x_swin: (B, C, H, W) float32."""
    B, C = x_cnn.shape[0], x_cnn.shape[1]
    xc = x_cnn.reshape(B, C, -1)
    xs = x_swin.reshape(B, C, -1)
    s_cnn = xc.shape[-1]
    s_swin = xs.shape[-1]

    # Pad batch to a sublane-aligned multiple of BATCH_TILE.
    bt = BATCH_TILE
    b_pad = ((B + bt - 1) // bt) * bt
    if b_pad != B:
        xc = jnp.pad(xc, ((0, b_pad - B), (0, 0), (0, 0)))
        xs = jnp.pad(xs, ((0, b_pad - B), (0, 0), (0, 0)))

    # bf16 activations in HBM (halves the memory-bound activation stream).
    xc = xc.astype(jnp.bfloat16)
    xs = xs.astype(jnp.bfloat16)

    s_tile = _choose_spatial_tile(s_cnn, bt, C)
    n_bt = b_pad // bt
    n_st = s_cnn // s_tile

    # Fused projection weights: 1/S mean folded in, zero-padded to 128 lanes.
    f32 = jnp.float32
    wpc_f = jnp.concatenate(
        [params["wpc"] / float(s_cnn), jnp.zeros((C, SWIN_FEAT), f32)], axis=1)
    wps_f = jnp.concatenate(
        [jnp.zeros((C, CNN_FEAT), f32), params["wps"] / float(s_swin)], axis=1)
    bproj = jnp.concatenate([params["bpc"], params["bps"]], axis=1)      # (1,128)
    w2p = jnp.concatenate(
        [params["w2"], jnp.zeros((HIDDEN, OUT_PAD - NUM_CLASSES), f32)], axis=1)
    b2p = jnp.concatenate(
        [params["b2"], jnp.zeros((1, OUT_PAD - NUM_CLASSES), f32)], axis=1)

    # Dropout multiplier (inverted dropout): {0, 1/(1-p)} in training, 1 in eval.
    if training:
        keep = jax.random.bernoulli(
            jax.random.PRNGKey(seed), 1.0 - DROP_P, (b_pad, HIDDEN))
        drop_mult = keep.astype(f32) * (1.0 / (1.0 - DROP_P))
    else:
        drop_mult = jnp.ones((b_pad, HIDDEN), f32)

    const2 = lambda b, s: (0, 0)  # resident weights/biases (fetched once)

    out = pl.pallas_call(
        hybrid_kernel,
        out_shape=jax.ShapeDtypeStruct((b_pad, OUT_PAD), jnp.float32),
        grid_spec=pltpu.PrefetchScalarGridSpec(
            num_scalar_prefetch=0,
            grid=(n_bt, n_st),
            in_specs=[
                # x_cnn: tiled over batch and the pooled spatial axis
                pl.BlockSpec((bt, C, s_tile), lambda b, s: (b, 0, s)),
                # x_swin: full spatial, resident per batch tile
                pl.BlockSpec((bt, C, s_swin), lambda b, s: (b, 0, 0)),
                pl.BlockSpec((C, PROJ), const2),
                pl.BlockSpec((C, PROJ), const2),
                pl.BlockSpec((1, PROJ), const2),
                pl.BlockSpec((PROJ, HIDDEN), const2),
                pl.BlockSpec((1, HIDDEN), const2),
                pl.BlockSpec((HIDDEN, OUT_PAD), const2),
                pl.BlockSpec((1, OUT_PAD), const2),
                # dropout multiplier: tiled over batch only
                pl.BlockSpec((bt, HIDDEN), lambda b, s: (b, 0)),
            ],
            out_specs=pl.BlockSpec((bt, OUT_PAD), lambda b, s: (b, 0)),
            scratch_shapes=[pltpu.VMEM((bt, C), jnp.float32)],
        ),
        compiler_params=pltpu.CompilerParams(
            dimension_semantics=("parallel", "arbitrary"),
            vmem_limit_bytes=32 * 1024 * 1024,
        ),
    )(xc, xs, wpc_f, wps_f, bproj,
      params["w1"], params["b1"], w2p, b2p, drop_mult)

    return out[:B, :NUM_CLASSES]


# --------------------------- deterministic init ---------------------------
def init_params(key, c_cnn, c_swin):
    ks = jax.random.split(key, 8)

    def lin(kw, kb, fan_in, fan_out):
        bound = 1.0 / jnp.sqrt(fan_in)
        w = jax.random.uniform(kw, (fan_in, fan_out), jnp.float32, -bound, bound)
        b = jax.random.uniform(kb, (1, fan_out), jnp.float32, -bound, bound)
        return w, b

    wpc, bpc = lin(ks[0], ks[1], c_cnn, CNN_FEAT)
    wps, bps = lin(ks[2], ks[3], c_swin, SWIN_FEAT)
    w1, b1 = lin(ks[4], ks[5], CNN_FEAT + SWIN_FEAT, HIDDEN)
    w2, b2 = lin(ks[6], ks[7], HIDDEN, NUM_CLASSES)
    return dict(wpc=wpc, bpc=bpc, wps=wps, bps=bps, w1=w1, b1=b1, w2=w2, b2=b2)


# --------------------------- pure-JAX reference ----------------------------
def ref_forward(x_cnn, x_swin, p):
    B, C = x_cnn.shape[0], x_cnn.shape[1]
    hp = jax.lax.Precision.HIGHEST
    xc = x_cnn.reshape(B, C, -1).astype(jnp.bfloat16).astype(jnp.float32)
    xs = x_swin.reshape(B, C, -1).astype(jnp.bfloat16).astype(jnp.float32)
    cf = jnp.maximum(jnp.dot(jnp.mean(xc, -1), p["wpc"], precision=hp) + p["bpc"], 0.0)
    sf = jnp.maximum(jnp.dot(jnp.mean(xs, -1), p["wps"], precision=hp) + p["bps"], 0.0)
    h = jnp.maximum(
        jnp.dot(jnp.concatenate([cf, sf], 1), p["w1"], precision=hp) + p["b1"], 0.0)
    return jnp.dot(h, p["w2"], precision=hp) + p["b2"]


# --------------------------------- main ------------------------------------
if __name__ == "__main__":
    key = jax.random.PRNGKey(0)
    k_cnn, k_swin, k_par = jax.random.split(key, 3)

    B, C = 2, 8
    x_cnn = jax.random.normal(k_cnn, (B, C, 16, 16, 16), jnp.float32)   # NCDHW
    x_swin = jax.random.normal(k_swin, (B, C, 32, 32), jnp.float32)     # NCHW
    params = init_params(k_par, C, C)

    # eval-mode forward (dropout = identity), checked against the JAX reference
    out = jax.block_until_ready(hybrid_forward(x_cnn, x_swin, params, training=False))
    assert out.shape == (B, NUM_CLASSES)

    expected = ref_forward(x_cnn, x_swin, params)
    max_err = float(jnp.max(jnp.abs(out - expected)))
    assert jnp.allclose(out, expected, atol=5e-3, rtol=5e-3), max_err

    # exercise the training/dropout path once
    out_tr = jax.block_until_ready(
        hybrid_forward(x_cnn, x_swin, params, training=True, seed=123))
    assert out_tr.shape == (B, NUM_CLASSES)
    assert bool(jnp.all(jnp.isfinite(out_tr)))

    print("KERNEL_OK")
</pallas_src>

<mosaic_0001>
module attributes {stable_mosaic.version = 11 : i64} {
  func.func @hybrid_kernel(%arg0: i32, %arg1: i32, %arg2: memref<8x8x2048xbf16, #tpu.memory_space<vmem>>, %arg3: memref<8x8x1024xbf16, #tpu.memory_space<vmem>>, %arg4: memref<8x128xf32, #tpu.memory_space<vmem>>, %arg5: memref<8x128xf32, #tpu.memory_space<vmem>>, %arg6: memref<1x128xf32, #tpu.memory_space<vmem>>, %arg7: memref<128x512xf32, #tpu.memory_space<vmem>>, %arg8: memref<1x512xf32, #tpu.memory_space<vmem>>, %arg9: memref<512x128xf32, #tpu.memory_space<vmem>>, %arg10: memref<1x128xf32, #tpu.memory_space<vmem>>, %arg11: memref<8x512xf32, #tpu.memory_space<vmem>>, %arg12: memref<8x128xf32, #tpu.memory_space<vmem>>, %arg13: memref<8x8xf32, #tpu.memory_space<vmem>>) attributes {dimension_semantics = [#tpu.dimension_semantics<parallel>, #tpu.dimension_semantics<arbitrary>], iteration_bounds = array<i64: 1, 2>, scalar_prefetch = 0 : i64, scratch_operands = 1 : i64, tpu.core_type = #tpu.core_type<tc>, window_params = [{transform_indices = @transform_0, window_bounds = array<i64: 8, 8, 2048>}, {transform_indices = @transform_1, window_bounds = array<i64: 8, 8, 1024>}, {pipeline_mode = #tpu.pipeline_mode<synchronous>, transform_indices = @transform_2, window_bounds = array<i64: 8, 128>}, {pipeline_mode = #tpu.pipeline_mode<synchronous>, transform_indices = @transform_3, window_bounds = array<i64: 8, 128>}, {pipeline_mode = #tpu.pipeline_mode<synchronous>, transform_indices = @transform_4, window_bounds = array<i64: 1, 128>}, {pipeline_mode = #tpu.pipeline_mode<synchronous>, transform_indices = @transform_5, window_bounds = array<i64: 128, 512>}, {pipeline_mode = #tpu.pipeline_mode<synchronous>, transform_indices = @transform_6, window_bounds = array<i64: 1, 512>}, {pipeline_mode = #tpu.pipeline_mode<synchronous>, transform_indices = @transform_7, window_bounds = array<i64: 512, 128>}, {pipeline_mode = #tpu.pipeline_mode<synchronous>, transform_indices = @transform_8, window_bounds = array<i64: 1, 128>}, {transform_indices = @transform_9, window_bounds = array<i64: 8, 512>}, {transform_indices = @transform_10, window_bounds = array<i64: 8, 128>}]} {
    %c0_i32 = arith.constant 0 : i32
    %0 = arith.cmpi eq, %arg1, %c0_i32 : i32
    %1 = arith.extui %0 : i1 to i32
    %c0_i32_0 = arith.constant 0 : i32
    %2 = arith.cmpi ne, %1, %c0_i32_0 : i32
    scf.if %2 {
      %cst_8 = arith.constant 0.000000e+00 : f32
      %12 = vector.broadcast %cst_8 : f32 to vector<8x8xf32>
      %c0_9 = arith.constant 0 : index
      %c0_10 = arith.constant 0 : index
      %13 = vector.load %arg13[%c0_9, %c0_10] : memref<8x8xf32, #tpu.memory_space<vmem>>, vector<8x8xf32>
      tpu.vector_store %arg13[%c0_9, %c0_10], %12 {strides = array<i32>} : memref<8x8xf32, #tpu.memory_space<vmem>>, vector<8x8xf32>,
    } else {
    }
    %c0 = arith.constant 0 : index
    %c0_1 = arith.constant 0 : index
    %3 = vector.load %arg13[%c0, %c0_1] : memref<8x8xf32, #tpu.memory_space<vmem>>, vector<8x8xf32>
    %c0_2 = arith.constant 0 : index
    %c0_3 = arith.constant 0 : index
    %c0_4 = arith.constant 0 : index
    %4 = vector.load %arg2[%c0_2, %c0_3, %c0_4] : memref<8x8x2048xbf16, #tpu.memory_space<vmem>>, vector<8x8x2048xbf16>
    %5 = arith.extf %4 : vector<8x8x2048xbf16> to vector<8x8x2048xf32>
    %cst = arith.constant dense<0.000000e+00> : vector<8x8xf32>
    %6 = vector.multi_reduction <add>, %5, %cst [2] : vector<8x8x2048xf32> to vector<8x8xf32>
    %7 = arith.addf %3, %6 : vector<8x8xf32>
    %c0_5 = arith.constant 0 : index
    %c0_6 = arith.constant 0 : index
    %8 = vector.load %arg13[%c0_5, %c0_6] : memref<8x8xf32, #tpu.memory_space<vmem>>, vector<8x8xf32>
    tpu.vector_store %arg13[%c0_5, %c0_6], %7 {strides = array<i32>} : memref<8x8xf32, #tpu.memory_space<vmem>>, vector<8x8xf32>,
    %c1_i32 = arith.constant 1 : i32
    %9 = arith.cmpi eq, %arg1, %c1_i32 : i32
    %10 = arith.extui %9 : i1 to i32
    %c0_i32_7 = arith.constant 0 : i32
    %11 = arith.cmpi ne, %10, %c0_i32_7 : i32
    scf.if %11 {
      %c0_8 = arith.constant 0 : index
      %c0_9 = arith.constant 0 : index
      %12 = vector.load %arg13[%c0_8, %c0_9] : memref<8x8xf32, #tpu.memory_space<vmem>>, vector<8x8xf32>
      %c0_10 = arith.constant 0 : index
      %c0_11 = arith.constant 0 : index
      %c0_12 = arith.constant 0 : index
      %13 = vector.load %arg3[%c0_10, %c0_11, %c0_12] : memref<8x8x1024xbf16, #tpu.memory_space<vmem>>, vector<8x8x1024xbf16>
      %14 = arith.extf %13 : vector<8x8x1024xbf16> to vector<8x8x1024xf32>
      %cst_13 = arith.constant dense<0.000000e+00> : vector<8x8xf32>
      %15 = vector.multi_reduction <add>, %14, %cst_13 [2] : vector<8x8x1024xf32> to vector<8x8xf32>
      %c0_14 = arith.constant 0 : index
      %c0_15 = arith.constant 0 : index
      %16 = vector.load %arg4[%c0_14, %c0_15] : memref<8x128xf32, #tpu.memory_space<vmem>>, vector<8x128xf32>
      %cst_16 = arith.constant dense<0.000000e+00> : vector<8x128xf32>
      %17 = tpu.matmul %12, %16, %cst_16 {dimension_numbers = #tpu.dot_dimension_numbers<[1], [0], [0], [1], [0, 0, 1, 1], [], []>} : vector<8x8xf32>, vector<8x128xf32>, vector<8x128xf32> -> vector<8x128xf32>
      %c0_17 = arith.constant 0 : index
      %c0_18 = arith.constant 0 : index
      %18 = vector.load %arg5[%c0_17, %c0_18] : memref<8x128xf32, #tpu.memory_space<vmem>>, vector<8x128xf32>
      %cst_19 = arith.constant dense<0.000000e+00> : vector<8x128xf32>
      %19 = tpu.matmul %15, %18, %cst_19 {dimension_numbers = #tpu.dot_dimension_numbers<[1], [0], [0], [1], [0, 0, 1, 1], [], []>} : vector<8x8xf32>, vector<8x128xf32>, vector<8x128xf32> -> vector<8x128xf32>
      %20 = arith.addf %17, %19 : vector<8x128xf32>
      %c0_20 = arith.constant 0 : index
      %c0_21 = arith.constant 0 : index
      %21 = vector.load %arg6[%c0_20, %c0_21] : memref<1x128xf32, #tpu.memory_space<vmem>>, vector<1x128xf32>
      %22 = vector.broadcast %21 : vector<1x128xf32> to vector<8x128xf32>
      %23 = arith.addf %20, %22 : vector<8x128xf32>
      %cst_22 = arith.constant 0.000000e+00 : f32
      %24 = vector.broadcast %cst_22 : f32 to vector<8x128xf32>
      %25 = arith.maximumf %23, %24 : vector<8x128xf32>
      %c0_23 = arith.constant 0 : index
      %c0_24 = arith.constant 0 : index
      %26 = vector.load %arg7[%c0_23, %c0_24] : memref<128x512xf32, #tpu.memory_space<vmem>>, vector<128x512xf32>
      %cst_25 = arith.constant dense<0.000000e+00> : vector<8x512xf32>
      %27 = tpu.matmul %25, %26, %cst_25 {dimension_numbers = #tpu.dot_dimension_numbers<[1], [0], [0], [1], [0, 0, 1, 1], [], []>} : vector<8x128xf32>, vector<128x512xf32>, vector<8x512xf32> -> vector<8x512xf32>
      %c0_26 = arith.constant 0 : index
      %c0_27 = arith.constant 0 : index
      %28 = vector.load %arg8[%c0_26, %c0_27] : memref<1x512xf32, #tpu.memory_space<vmem>>, vector<1x512xf32>
      %29 = vector.broadcast %28 : vector<1x512xf32> to vector<8x512xf32>
      %30 = arith.addf %27, %29 : vector<8x512xf32>
      %cst_28 = arith.constant 0.000000e+00 : f32
      %31 = vector.broadcast %cst_28 : f32 to vector<8x512xf32>
      %32 = arith.maximumf %30, %31 : vector<8x512xf32>
      %c0_29 = arith.constant 0 : index
      %c0_30 = arith.constant 0 : index
      %33 = vector.load %arg11[%c0_29, %c0_30] : memref<8x512xf32, #tpu.memory_space<vmem>>, vector<8x512xf32>
      %34 = arith.mulf %32, %33 : vector<8x512xf32>
      %c0_31 = arith.constant 0 : index
      %c0_32 = arith.constant 0 : index
      %35 = vector.load %arg9[%c0_31, %c0_32] : memref<512x128xf32, #tpu.memory_space<vmem>>, vector<512x128xf32>
      %cst_33 = arith.constant dense<0.000000e+00> : vector<8x128xf32>
      %36 = tpu.matmul %34, %35, %cst_33 {dimension_numbers = #tpu.dot_dimension_numbers<[1], [0], [0], [1], [0, 0, 1, 1], [], []>} : vector<8x512xf32>, vector<512x128xf32>, vector<8x128xf32> -> vector<8x128xf32>
      %c0_34 = arith.constant 0 : index
      %c0_35 = arith.constant 0 : index
      %37 = vector.load %arg10[%c0_34, %c0_35] : memref<1x128xf32, #tpu.memory_space<vmem>>, vector<1x128xf32>
      %38 = vector.broadcast %37 : vector<1x128xf32> to vector<8x128xf32>
      %39 = arith.addf %36, %38 : vector<8x128xf32>
      %c0_36 = arith.constant 0 : index
      %c0_37 = arith.constant 0 : index
      %40 = vector.load %arg12[%c0_36, %c0_37] : memref<8x128xf32, #tpu.memory_space<vmem>>, vector<8x128xf32>
      tpu.vector_store %arg12[%c0_36, %c0_37], %39 {strides = array<i32>} : memref<8x128xf32, #tpu.memory_space<vmem>>, vector<8x128xf32>,
    } else {
    }
    return
  }
  func.func @transform_0(%arg0: i32, %arg1: i32) -> (i32, i32, i32) {
    %c0_i32 = arith.constant 0 : i32
    %c0_i32_0 = arith.constant 0 : i32
    return %arg0, %c0_i32, %arg1 : i32, i32, i32
  }
  func.func @transform_1(%arg0: i32, %arg1: i32) -> (i32, i32, i32) {
    %c0_i32 = arith.constant 0 : i32
    %c0_i32_0 = arith.constant 0 : i32
    %c0_i32_1 = arith.constant 0 : i32
    return %arg0, %c0_i32, %c0_i32_0 : i32, i32, i32
  }
  func.func @transform_2(%arg0: i32, %arg1: i32) -> (i32, i32) {
    %c0_i32 = arith.constant 0 : i32
    %c0_i32_0 = arith.constant 0 : i32
    %c0_i32_1 = arith.constant 0 : i32
    return %c0_i32, %c0_i32_0 : i32, i32
  }
  func.func @transform_3(%arg0: i32, %arg1: i32) -> (i32, i32) {
    %c0_i32 = arith.constant 0 : i32
    %c0_i32_0 = arith.constant 0 : i32
    %c0_i32_1 = arith.constant 0 : i32
    return %c0_i32, %c0_i32_0 : i32, i32
  }
  func.func @transform_4(%arg0: i32, %arg1: i32) -> (i32, i32) {
    %c0_i32 = arith.constant 0 : i32
    %c0_i32_0 = arith.constant 0 : i32
    %c0_i32_1 = arith.constant 0 : i32
    return %c0_i32, %c0_i32_0 : i32, i32
  }
  func.func @transform_5(%arg0: i32, %arg1: i32) -> (i32, i32) {
    %c0_i32 = arith.constant 0 : i32
    %c0_i32_0 = arith.constant 0 : i32
    %c0_i32_1 = arith.constant 0 : i32
    return %c0_i32, %c0_i32_0 : i32, i32
  }
  func.func @transform_6(%arg0: i32, %arg1: i32) -> (i32, i32) {
    %c0_i32 = arith.constant 0 : i32
    %c0_i32_0 = arith.constant 0 : i32
    %c0_i32_1 = arith.constant 0 : i32
    return %c0_i32, %c0_i32_0 : i32, i32
  }
  func.func @transform_7(%arg0: i32, %arg1: i32) -> (i32, i32) {
    %c0_i32 = arith.constant 0 : i32
    %c0_i32_0 = arith.constant 0 : i32
    %c0_i32_1 = arith.constant 0 : i32
    return %c0_i32, %c0_i32_0 : i32, i32
  }
  func.func @transform_8(%arg0: i32, %arg1: i32) -> (i32, i32) {
    %c0_i32 = arith.constant 0 : i32
    %c0_i32_0 = arith.constant 0 : i32
    %c0_i32_1 = arith.constant 0 : i32
    return %c0_i32, %c0_i32_0 : i32, i32
  }
  func.func @transform_9(%arg0: i32, %arg1: i32) -> (i32, i32) {
    %c0_i32 = arith.constant 0 : i32
    %c0_i32_0 = arith.constant 0 : i32
    return %arg0, %c0_i32 : i32, i32
  }
  func.func @transform_10(%arg0: i32, %arg1: i32) -> (i32, i32) {
    %c0_i32 = arith.constant 0 : i32
    %c0_i32_0 = arith.constant 0 : i32
    return %arg0, %c0_i32 : i32, i32
  }
}

</mosaic_0001>

<llo_original>
// kernel: tpu_custom_call.1
$region0: #{tpu_custom_call.1}
  #allocation0 [shape = 'u32[]', space=smem, size = 0x4, offset = 0x4, fixed_abs, tag = 'smem constant byte address 0x4 - core index']
  #allocation1 [shape = 'u32[144,128]{1,0:T(1,128)}', space=vmem, size = 0x12000, scoped, tag = 'internal scratch']
  #allocation2 [shape = 'f32[8,8]{1,0:T(8,128)}', space=vmem, size = 0x1000, scoped, tag = 'scratch operand']
  %s0 = inlined_call_operand.hbm [shape: bf16[8,8,4096], index: 0, kind: input, shape index: {}]
  %s1 = inlined_call_operand.hbm [shape: bf16[8,8,1024], index: 1, kind: input, shape index: {}]
  %s2 = inlined_call_operand.hbm [shape: f32[8,128], index: 2, kind: input, shape index: {}]
  %s3 = inlined_call_operand.hbm [shape: f32[8,128], index: 3, kind: input, shape index: {}]
  %s4 = inlined_call_operand.vmem [shape: f32[1,128], index: 4, kind: input, shape index: {}]
  %s5 = inlined_call_operand.hbm [shape: f32[128,512], index: 5, kind: input, shape index: {}]
  %s6 = inlined_call_operand.vmem [shape: f32[1,512], index: 6, kind: input, shape index: {}]
  %s7 = inlined_call_operand.hbm [shape: f32[512,128], index: 7, kind: input, shape index: {}]
  %s8 = inlined_call_operand.vmem [shape: f32[1,128], index: 8, kind: input, shape index: {}]
  %s9 = inlined_call_operand.hbm [shape: f32[8,512], index: 9, kind: input, shape index: {}]
  %s10 = inlined_call_operand.hbm [shape: f32[8,128], index: 10, kind: output, shape index: {}]
  %s11 = sld [smem:[#allocation0]]
  $region109: #{tpu_custom_call.1} parent=0
    _
  %s13 = ssub.s32 1, %s11
  %s14 = scalar_select 0, %s13, %s11
  $region1: #{tpu_custom_call.1} parent=0
    #allocation3 [shape = 'u8[524288]{0}', space=vmem, size = 0x80000, scoped, tag = 'input window, operand 0']
    #allocation4 [shape = 's32[2]{0}', space=sflag, size = 0x8, scoped, tag = 'scoped memory for tpu_custom_call.1']
    #allocation5 [shape = 's32[2]{0}', space=sflag, size = 0x8, scoped, tag = 'scoped memory for tpu_custom_call.1']
    #allocation6 [shape = 'u8[131072]{0}', space=vmem, size = 0x20000, scoped, tag = 'input window, operand 1, single buffered']
    #allocation7 [shape = 's32[1]{0}', space=sflag, size = 0x4, scoped, tag = 'scoped memory for tpu_custom_call.1']
    #allocation8 [shape = 'u8[4096]{0}', space=vmem, size = 0x1000, scoped, tag = 'input window, operand 2, single buffered']
    #allocation9 [shape = 'u8[4096]{0}', space=vmem, size = 0x1000, scoped, tag = 'input window, operand 3, single buffered']
    #allocation10 [shape = 's32[1]{0}', space=sflag, size = 0x4, scoped, tag = 'scoped memory for tpu_custom_call.1']
    #allocation11 [shape = 'u8[262144]{0}', space=vmem, size = 0x40000, scoped, tag = 'input window, operand 5, single buffered']
    #allocation12 [shape = 'u8[262144]{0}', space=vmem, size = 0x40000, scoped, tag = 'input window, operand 7, single buffered']
    #allocation13 [shape = 's32[1]{0}', space=sflag, size = 0x4, scoped, tag = 'scoped memory for tpu_custom_call.1']
    #allocation14 [shape = 'u8[16384]{0}', space=vmem, size = 0x4000, scoped, tag = 'input window, operand 9, single buffered']
    #allocation15 [shape = 'u8[4096]{0}', space=vmem, size = 0x1000, scoped, tag = 'output window, operand 0, single buffered']
    %15 = vsyncpa [#allocation4], 0
    %s16 = scalar_lea.sflag [#allocation4], 1
    %17 = vsyncpa %s16, 0
    %18 = vsyncpa [#allocation7], 0
    %19 = vsyncpa [#allocation10], 0
    %20 = vsyncpa [#allocation13], 0
    %21 = vsyncpa [#allocation5], 0
    loop: start=0, step=1, limit=4
    $region2: #{tpu_custom_call.1} parent=1 // loop_pre_header
      _
    $region3: #{tpu_custom_call.1} parent=1 // loop_header
      %s23 = sphi 0, %s27
      %p24 = scmp.ge.s32.totalorder %s23, 4
      %s30 = sphi 0, %s42
      %s31 = sphi 0, %s38
      %s32 = sphi 0, %s30
      %s33 = sphi 0, %s31
      %s34 = sphi 0, %s32
      %s35 = sphi 0, %s33
      %s47 = sphi 0, %s49
      %s50 = sphi 0, %s47
      %s51 = sphi 0, %s50
      %s67 = sphi 0, %s51
      %s73 = sphi 0, %s75
      %s76 = sphi 0, %s73
      %s77 = sphi 0, %s76
      %s93 = sphi 0, %s77
      %s97 = sphi 0, %s97
      %s99 = sphi 0, %s97
      %s100 = sphi 0, %s99
      %s114 = sphi 0, %s100
      %s118 = sphi 0, %s118
      %s120 = sphi 0, %s118
      %s121 = sphi 0, %s120
      %s135 = sphi 0, %s121
      %s139 = sphi 0, %s139
      %s141 = sphi 0, %s139
      %s142 = sphi 0, %s141
      %s156 = sphi 0, %s142
      %s160 = sphi 0, %s160
      %s162 = sphi 0, %s160
      %s163 = sphi 0, %s162
      %s177 = sphi 0, %s163
      %s181 = sphi 0, %s181
      %s183 = sphi 0, %s181
      %s184 = sphi 0, %s183
      %s198 = sphi 0, %s184
      %s202 = sphi 0, %s202
      %s204 = sphi 0, %s202
      %s205 = sphi 0, %s204
      %s219 = sphi 0, %s205
      %s223 = sphi 0, %s223
      %s225 = sphi 0, %s223
      %s226 = sphi 0, %s225
      %s240 = sphi 0, %s226
      %s246 = sphi 0, %s248
      %s249 = sphi 0, %s246
      %s250 = sphi 0, %s249
      %s266 = sphi 0, %s250
      %s272 = sphi 0, %s274
      %s275 = sphi 0, %s272
      %s276 = sphi 0, %s275
      %s292 = sphi 0, %s276
    $region4: #{tpu_custom_call.1} parent=1 // loop_header_branch
      %26 = sbr.rel (%p24) target = $region8
    $region5: #{tpu_custom_call.1} parent=1 // loop_body
      %s28 = ssub.s32 %s23, 1
      %s29 = ssub.s32 %s23, 2
      %s36 = sadd.s32 1, %s31
      %p37 = scmp.ge.s32.totalorder %s36, 2
      %s38 = scalar_select %p37, 0, %s36
      %s39 = sadd.s32 1, %s30
      %s40 = scalar_select %p37, %s39, %s30
      %p41 = scmp.ge.s32.totalorder %s40, 1
      %s42 = scalar_select %p41, 0, %s40
      %s43 = ssub.s32 %s30, %s42
      %s44 = ssub.s32 %s31, %s38
      %s45 = sor.u32 %s43, %s44
      %p46 = scmp.eq.s32.totalorder %s45, 0
      %s48 = sadd.s32 %s47, 1
      %s49 = scalar_select %p46, %s47, %s48
      %p52 = pneg %p46
      %p53 = scmp.eq.s32.totalorder %s23, 1
      %p54 = por %p52, %p53
      %p55 = scmp.ne.s32.totalorder %s47, %s50
      %p56 = scmp.eq.s32.totalorder %s23, 0
      %p57 = por %p55, %p56
      %p58 = scmp.ne.s32.totalorder %s47, %s50
      %p59 = scmp.eq.s32.totalorder %s28, 1
      %p60 = por %p58, %p59
      %p61 = scmp.ne.s32.totalorder %s50, %s51
      %p62 = scmp.eq.s32.totalorder %s28, 0
      %p63 = por %p61, %p62
      %p64 = scmp.ne.s32.totalorder %s50, %s51
      %p65 = scmp.eq.s32.totalorder %s29, 1
      %p66 = por %p64, %p65
      %p68 = scmp.ne.s32.totalorder %s51, %s67
      %p69 = scmp.eq.s32.totalorder %s29, 0
      %p70 = por %p68, %p69
      %s71 = ssub.s32 %s30, %s42
      %p72 = scmp.eq.s32.totalorder %s71, 0
      %s74 = sadd.s32 %s73, 1
      %s75 = scalar_select %p72, %s73, %s74
      %p78 = pneg %p72
      %p79 = scmp.eq.s32.totalorder %s23, 1
      %p80 = por %p78, %p79
      %p81 = scmp.ne.s32.totalorder %s73, %s76
      %p82 = scmp.eq.s32.totalorder %s23, 0
      %p83 = por %p81, %p82
      %p84 = scmp.ne.s32.totalorder %s73, %s76
      %p85 = scmp.eq.s32.totalorder %s28, 1
      %p86 = por %p84, %p85
      %p87 = scmp.ne.s32.totalorder %s76, %s77
      %p88 = scmp.eq.s32.totalorder %s28, 0
      %p89 = por %p87, %p88
      %p90 = scmp.ne.s32.totalorder %s76, %s77
      %p91 = scmp.eq.s32.totalorder %s29, 1
      %p92 = por %p90, %p91
      %p94 = scmp.ne.s32.totalorder %s77, %s93
      %p95 = scmp.eq.s32.totalorder %s29, 0
      %p96 = por %p94, %p95
      %s98 = sadd.s32 %s97, 1
      %p101 = scmp.eq.s32.totalorder %s23, 1
      %p102 = scmp.ne.s32.totalorder %s97, %s99
      %p103 = scmp.eq.s32.totalorder %s23, 0
      %p104 = por %p102, %p103
      %p105 = scmp.ne.s32.totalorder %s97, %s99
      %p106 = scmp.eq.s32.totalorder %s28, 1
      %p107 = por %p105, %p106
      %p108 = scmp.ne.s32.totalorder %s99, %s100
      %p109 = scmp.eq.s32.totalorder %s28, 0
      %p110 = por %p108, %p109
      %p111 = scmp.ne.s32.totalorder %s99, %s100
      %p112 = scmp.eq.s32.totalorder %s29, 1
      %p113 = por %p111, %p112
      %p115 = scmp.ne.s32.totalorder %s100, %s114
      %p116 = scmp.eq.s32.totalorder %s29, 0
      %p117 = por %p115, %p116
      %s119 = sadd.s32 %s118, 1
      %p122 = scmp.eq.s32.totalorder %s23, 1
      %p123 = scmp.ne.s32.totalorder %s118, %s120
      %p124 = scmp.eq.s32.totalorder %s23, 0
      %p125 = por %p123, %p124
      %p126 = scmp.ne.s32.totalorder %s118, %s120
      %p127 = scmp.eq.s32.totalorder %s28, 1
      %p128 = por %p126, %p127
      %p129 = scmp.ne.s32.totalorder %s120, %s121
      %p130 = scmp.eq.s32.totalorder %s28, 0
      %p131 = por %p129, %p130
      %p132 = scmp.ne.s32.totalorder %s120, %s121
      %p133 = scmp.eq.s32.totalorder %s29, 1
      %p134 = por %p132, %p133
      %p136 = scmp.ne.s32.totalorder %s121, %s135
      %p137 = scmp.eq.s32.totalorder %s29, 0
      %p138 = por %p136, %p137
      %s140 = sadd.s32 %s139, 1
      %p143 = scmp.eq.s32.totalorder %s23, 1
      %p144 = scmp.ne.s32.totalorder %s139, %s141
      %p145 = scmp.eq.s32.totalorder %s23, 0
      %p146 = por %p144, %p145
      %p147 = scmp.ne.s32.totalorder %s139, %s141
      %p148 = scmp.eq.s32.totalorder %s28, 1
      %p149 = por %p147, %p148
      %p150 = scmp.ne.s32.totalorder %s141, %s142
      %p151 = scmp.eq.s32.totalorder %s28, 0
      %p152 = por %p150, %p151
      %p153 = scmp.ne.s32.totalorder %s141, %s142
      %p154 = scmp.eq.s32.totalorder %s29, 1
      %p155 = por %p153, %p154
      %p157 = scmp.ne.s32.totalorder %s142, %s156
      %p158 = scmp.eq.s32.totalorder %s29, 0
      %p159 = por %p157, %p158
      %s161 = sadd.s32 %s160, 1
      %p164 = scmp.eq.s32.totalorder %s23, 1
      %p165 = scmp.ne.s32.totalorder %s160, %s162
      %p166 = scmp.eq.s32.totalorder %s23, 0
      %p167 = por %p165, %p166
      %p168 = scmp.ne.s32.totalorder %s160, %s162
      %p169 = scmp.eq.s32.totalorder %s28, 1
      %p170 = por %p168, %p169
      %p171 = scmp.ne.s32.totalorder %s162, %s163
      %p172 = scmp.eq.s32.totalorder %s28, 0
      %p173 = por %p171, %p172
      %p174 = scmp.ne.s32.totalorder %s162, %s163
      %p175 = scmp.eq.s32.totalorder %s29, 1
      %p176 = por %p174, %p175
      %p178 = scmp.ne.s32.totalorder %s163, %s177
      %p179 = scmp.eq.s32.totalorder %s29, 0
      %p180 = por %p178, %p179
      %s182 = sadd.s32 %s181, 1
      %p185 = scmp.eq.s32.totalorder %s23, 1
      %p186 = scmp.ne.s32.totalorder %s181, %s183
      %p187 = scmp.eq.s32.totalorder %s23, 0
      %p188 = por %p186, %p187
      %p189 = scmp.ne.s32.totalorder %s181, %s183
      %p190 = scmp.eq.s32.totalorder %s28, 1
      %p191 = por %p189, %p190
      %p192 = scmp.ne.s32.totalorder %s183, %s184
      %p193 = scmp.eq.s32.totalorder %s28, 0
      %p194 = por %p192, %p193
      %p195 = scmp.ne.s32.totalorder %s183, %s184
      %p196 = scmp.eq.s32.totalorder %s29, 1
      %p197 = por %p195, %p196
      %p199 = scmp.ne.s32.totalorder %s184, %s198
      %p200 = scmp.eq.s32.totalorder %s29, 0
      %p201 = por %p199, %p200
      %s203 = sadd.s32 %s202, 1
      %p206 = scmp.eq.s32.totalorder %s23, 1
      %p207 = scmp.ne.s32.totalorder %s202, %s204
      %p208 = scmp.eq.s32.totalorder %s23, 0
      %p209 = por %p207, %p208
      %p210 = scmp.ne.s32.totalorder %s202, %s204
      %p211 = scmp.eq.s32.totalorder %s28, 1
      %p212 = por %p210, %p211
      %p213 = scmp.ne.s32.totalorder %s204, %s205
      %p214 = scmp.eq.s32.totalorder %s28, 0
      %p215 = por %p213, %p214
      %p216 = scmp.ne.s32.totalorder %s204, %s205
      %p217 = scmp.eq.s32.totalorder %s29, 1
      %p218 = por %p216, %p217
      %p220 = scmp.ne.s32.totalorder %s205, %s219
      %p221 = scmp.eq.s32.totalorder %s29, 0
      %p222 = por %p220, %p221
      %s224 = sadd.s32 %s223, 1
      %p227 = scmp.eq.s32.totalorder %s23, 1
      %p228 = scmp.ne.s32.totalorder %s223, %s225
      %p229 = scmp.eq.s32.totalorder %s23, 0
      %p230 = por %p228, %p229
      %p231 = scmp.ne.s32.totalorder %s223, %s225
      %p232 = scmp.eq.s32.totalorder %s28, 1
      %p233 = por %p231, %p232
      %p234 = scmp.ne.s32.totalorder %s225, %s226
      %p235 = scmp.eq.s32.totalorder %s28, 0
      %p236 = por %p234, %p235
      %p237 = scmp.ne.s32.totalorder %s225, %s226
      %p238 = scmp.eq.s32.totalorder %s29, 1
      %p239 = por %p237, %p238
      %p241 = scmp.ne.s32.totalorder %s226, %s240
      %p242 = scmp.eq.s32.totalorder %s29, 0
      %p243 = por %p241, %p242
      %s244 = ssub.s32 %s30, %s42
      %p245 = scmp.eq.s32.totalorder %s244, 0
      %s247 = sadd.s32 %s246, 1
      %s248 = scalar_select %p245, %s246, %s247
      %p251 = pneg %p245
      %p252 = scmp.eq.s32.totalorder %s23, 1
      %p253 = por %p251, %p252
      %p254 = scmp.ne.s32.totalorder %s246, %s249
      %p255 = scmp.eq.s32.totalorder %s23, 0
      %p256 = por %p254, %p255
      %p257 = scmp.ne.s32.totalorder %s246, %s249
      %p258 = scmp.eq.s32.totalorder %s28, 1
      %p259 = por %p257, %p258
      %p260 = scmp.ne.s32.totalorder %s249, %s250
      %p261 = scmp.eq.s32.totalorder %s28, 0
      %p262 = por %p260, %p261
      %p263 = scmp.ne.s32.totalorder %s249, %s250
      %p264 = scmp.eq.s32.totalorder %s29, 1
      %p265 = por %p263, %p264
      %p267 = scmp.ne.s32.totalorder %s250, %s266
      %p268 = scmp.eq.s32.totalorder %s29, 0
      %p269 = por %p267, %p268
      %s270 = ssub.s32 %s30, %s42
      %p271 = scmp.eq.s32.totalorder %s270, 0
      %s273 = sadd.s32 %s272, 1
      %s274 = scalar_select %p271, %s272, %s273
      %p277 = pneg %p271
      %p278 = scmp.eq.s32.totalorder %s23, 1
      %p279 = por %p277, %p278
      %p280 = scmp.ne.s32.totalorder %s272, %s275
      %p281 = scmp.eq.s32.totalorder %s23, 0
      %p282 = por %p280, %p281
      %p283 = scmp.ne.s32.totalorder %s272, %s275
      %p284 = scmp.eq.s32.totalorder %s28, 1
      %p285 = por %p283, %p284
      %p286 = scmp.ne.s32.totalorder %s275, %s276
      %p287 = scmp.eq.s32.totalorder %s28, 0
      %p288 = por %p286, %p287
      %p289 = scmp.ne.s32.totalorder %s275, %s276
      %p290 = scmp.eq.s32.totalorder %s29, 1
      %p291 = por %p289, %p290
      %p293 = scmp.ne.s32.totalorder %s276, %s292
      %p294 = scmp.eq.s32.totalorder %s29, 0
      %p295 = por %p293, %p294
      %p296 = scmp.le.s32.totalorder 1, %s23
      %p297 = scmp.lt.s32.totalorder %s23, 3
      %p298 = pnand %p296, %p297
      %p299 = pneg %p298
      // Predicated region
      $region9: #{tpu_custom_call.1} parent=5 // pred_check
        _
      $region10: #{tpu_custom_call.1} parent=5 // pred_check_branch
        %301 = sbr.rel (%p298) target = $region12
      $region11: #{tpu_custom_call.1} parent=5 // pred_region
        %s302 = ssub.s32 %s23, 1
        // Predicated region
        $region13: #{tpu_custom_call.1} parent=11 // pred_check
          %p303 = pneg %p89
        $region14: #{tpu_custom_call.1} parent=11 // pred_check_branch
          %305 = sbr.rel (%p303) target = $region16
        $region15: #{tpu_custom_call.1} parent=11 // pred_region
          %s306 = smul.u32 8, %s32
          %s308 = ssub.s32 4096, 4096
          %309 = vsyncadd [#allocation7], %s308
          %s310 = smul.addr %s306, 8
          %s311 = smul.addr %s310, 64
          %s312 = scalar_lea.hbm %s1, %s311
          %s313 = sshll.u32 [#allocation6], 4
          %s314 = int_to_ptr.vmem [resolvable:$true] %s313
          %319 = dma.hbm_to_vmem [thread:$0]  %s312, 4096, %s314, [#allocation7], 512, 512, 32
        $region16: #{tpu_custom_call.1} parent=11 // pred_fallthru
          _
        // Predicated region
        $region17: #{tpu_custom_call.1} parent=11 // pred_check
          %p320 = pneg %p110
        $region18: #{tpu_custom_call.1} parent=11 // pred_check_branch
          %322 = sbr.rel (%p320) target = $region20
        $region19: #{tpu_custom_call.1} parent=11 // pred_region
          %s324 = ssub.s32 128, 128
          %325 = vsyncadd [#allocation7], %s324
          %s327 = sshll.u32 [#allocation8], 4
          %s328 = int_to_ptr.vmem [resolvable:$true] %s327
          %330 = dma.hbm_to_vmem [thread:$0]  %s2, 128, %s328, [#allocation7]
        $region20: #{tpu_custom_call.1} parent=11 // pred_fallthru
          _
        // Predicated region
        $region21: #{tpu_custom_call.1} parent=11 // pred_check
          %p331 = pneg %p131
        $region22: #{tpu_custom_call.1} parent=11 // pred_check_branch
          %333 = sbr.rel (%p331) target = $region24
        $region23: #{tpu_custom_call.1} parent=11 // pred_region
          %s335 = ssub.s32 128, 128
          %336 = vsyncadd [#allocation10], %s335
          %s338 = sshll.u32 [#allocation9], 4
          %s339 = int_to_ptr.vmem [resolvable:$true] %s338
          %341 = dma.hbm_to_vmem [thread:$0]  %s3, 128, %s339, [#allocation10]
        $region24: #{tpu_custom_call.1} parent=11 // pred_fallthru
          _
        // Predicated region
        $region25: #{tpu_custom_call.1} parent=11 // pred_check
          %p342 = pneg %p152
        $region26: #{tpu_custom_call.1} parent=11 // pred_check_branch
          %344 = sbr.rel (%p342) target = $region28
        $region27: #{tpu_custom_call.1} parent=11 // pred_region
          _
        $region28: #{tpu_custom_call.1} parent=11 // pred_fallthru
          _
        // Predicated region
        $region29: #{tpu_custom_call.1} parent=11 // pred_check
          %p345 = pneg %p173
        $region30: #{tpu_custom_call.1} parent=11 // pred_check_branch
          %347 = sbr.rel (%p345) target = $region32
        $region31: #{tpu_custom_call.1} parent=11 // pred_region
          %s349 = ssub.s32 8192, 8192
          %350 = vsyncadd [#allocation10], %s349
          %s351 = sshll.u32 [#allocation11], 4
          %s352 = int_to_ptr.vmem [resolvable:$true] %s351
          %357 = dma.hbm_to_vmem [thread:$0]  %s5, 8192, %s352, [#allocation10], 512, 512, 32
        $region32: #{tpu_custom_call.1} parent=11 // pred_fallthru
          _
        // Predicated region
        $region33: #{tpu_custom_call.1} parent=11 // pred_check
          %p358 = pneg %p194
        $region34: #{tpu_custom_call.1} parent=11 // pred_check_branch
          %360 = sbr.rel (%p358) target = $region36
        $region35: #{tpu_custom_call.1} parent=11 // pred_region
          _
        $region36: #{tpu_custom_call.1} parent=11 // pred_fallthru
          _
        // Predicated region
        $region37: #{tpu_custom_call.1} parent=11 // pred_check
          %p361 = pneg %p215
        $region38: #{tpu_custom_call.1} parent=11 // pred_check_branch
          %363 = sbr.rel (%p361) target = $region40
        $region39: #{tpu_custom_call.1} parent=11 // pred_region
          %s365 = ssub.s32 8192, 8192
          %366 = vsyncadd [#allocation13], %s365
          %s367 = sshll.u32 [#allocation12], 4
          %s368 = int_to_ptr.vmem [resolvable:$true] %s367
          %373 = dma.hbm_to_vmem [thread:$0]  %s7, 8192, %s368, [#allocation13], 128, 128, 8
        $region40: #{tpu_custom_call.1} parent=11 // pred_fallthru
          _
        // Predicated region
        $region41: #{tpu_custom_call.1} parent=11 // pred_check
          %p374 = pneg %p236
        $region42: #{tpu_custom_call.1} parent=11 // pred_check_branch
          %376 = sbr.rel (%p374) target = $region44
        $region43: #{tpu_custom_call.1} parent=11 // pred_region
          _
        $region44: #{tpu_custom_call.1} parent=11 // pred_fallthru
          _
        // Predicated region
        $region45: #{tpu_custom_call.1} parent=11 // pred_check
          %p377 = pneg %p262
        $region46: #{tpu_custom_call.1} parent=11 // pred_check_branch
          %379 = sbr.rel (%p377) target = $region48
        $region47: #{tpu_custom_call.1} parent=11 // pred_region
          %s381 = ssub.s32 512, 512
          %382 = vsyncadd [#allocation13], %s381
          %s383 = smul.addr %s32, 4
          %s384 = smul.addr %s383, 128
          %s385 = scalar_lea.hbm %s9, %s384
          %s387 = sshll.u32 [#allocation14], 4
          %s388 = int_to_ptr.vmem [resolvable:$true] %s387
          %390 = dma.hbm_to_vmem [thread:$0]  %s385, 512, %s388, [#allocation13]
        $region48: #{tpu_custom_call.1} parent=11 // pred_fallthru
          _
      $region12: #{tpu_custom_call.1} parent=5 // pred_fallthru
        _
      %p391 = scmp.lt.s32.totalorder %s23, 2
      // Predicated region
      $region49: #{tpu_custom_call.1} parent=5 // pred_check
        %p392 = pneg %p391
      $region50: #{tpu_custom_call.1} parent=5 // pred_check_branch
        %394 = sbr.rel (%p392) target = $region52
      $region51: #{tpu_custom_call.1} parent=5 // pred_region
        // Predicated region
        $region53: #{tpu_custom_call.1} parent=51 // pred_check
          %p395 = pneg %p57
        $region54: #{tpu_custom_call.1} parent=51 // pred_check_branch
          %397 = sbr.rel (%p395) target = $region56
        $region55: #{tpu_custom_call.1} parent=51 // pred_region
          %s398 = sand.u32 %s47, 1
          %s399 = scalar_lea.sflag [#allocation4], %s398
          %s400 = sand.u32 %s47, 1
          %s401 = smul.addr %s400, 512
          %s402 = scalar_lea.vmem [#allocation3], %s401
          %s403 = smul.u32 8, %s30
          %s404 = smul.u32 16, %s31
          %s406 = ssub.s32 8192, 8192
          %407 = vsyncadd %s399, %s406
          %s408 = smul.addr %s403, 32
          %s409 = sadd.s32 %s404, %s408
          %s410 = smul.addr %s409, 64
          %s411 = scalar_lea.hbm %s0, %s410
          %s412 = sshll.u32 %s402, 4
          %s413 = int_to_ptr.vmem [resolvable:$true] %s412
          %418 = dma.hbm_to_vmem [thread:$0]  %s411, 8192, %s413, %s399, 2048, 1024, 64
        $region56: #{tpu_custom_call.1} parent=51 // pred_fallthru
          _
      $region52: #{tpu_custom_call.1} parent=5 // pred_fallthru
        _
      %p419 = scmp.le.s32.totalorder 1, %s23
      %p420 = scmp.lt.s32.totalorder %s23, 3
      %p421 = pnand %p419, %p420
      %p422 = pneg %p421
      // Predicated region
      $region57: #{tpu_custom_call.1} parent=5 // pred_check
        _
      $region58: #{tpu_custom_call.1} parent=5 // pred_check_branch
        %424 = sbr.rel (%p421) target = $region60
      $region59: #{tpu_custom_call.1} parent=5 // pred_region
        %s425 = ssub.s32 %s23, 1
        %s426 = sand.u32 %s50, 1
        %s427 = scalar_lea.sflag [#allocation4], %s426
        %s428 = sand.u32 %s50, 1
        %s429 = smul.addr %s428, 512
        %s430 = scalar_lea.vmem [#allocation3], %s429
        // Predicated region
        $region61: #{tpu_custom_call.1} parent=59 // pred_check
          %p431 = pneg %p63
        $region62: #{tpu_custom_call.1} parent=59 // pred_check_branch
          %433 = sbr.rel (%p431) target = $region64
        $region63: #{tpu_custom_call.1} parent=59 // pred_region
          %434 = dma.done %s427, 8192
        $region64: #{tpu_custom_call.1} parent=59 // pred_fallthru
          _
        // Predicated region
        $region65: #{tpu_custom_call.1} parent=59 // pred_check
          %p435 = pneg %p89
        $region66: #{tpu_custom_call.1} parent=59 // pred_check_branch
          %437 = sbr.rel (%p435) target = $region68
        $region67: #{tpu_custom_call.1} parent=59 // pred_region
          %438 = dma.done [#allocation7], 4096
        $region68: #{tpu_custom_call.1} parent=59 // pred_fallthru
          _
        // Predicated region
        $region69: #{tpu_custom_call.1} parent=59 // pred_check
          %p439 = pneg %p110
        $region70: #{tpu_custom_call.1} parent=59 // pred_check_branch
          %441 = sbr.rel (%p439) target = $region72
        $region71: #{tpu_custom_call.1} parent=59 // pred_region
          %442 = dma.done [#allocation7], 128
        $region72: #{tpu_custom_call.1} parent=59 // pred_fallthru
          _
        // Predicated region
        $region73: #{tpu_custom_call.1} parent=59 // pred_check
          %p443 = pneg %p131
        $region74: #{tpu_custom_call.1} parent=59 // pred_check_branch
          %445 = sbr.rel (%p443) target = $region76
        $region75: #{tpu_custom_call.1} parent=59 // pred_region
          %446 = dma.done [#allocation10], 128
        $region76: #{tpu_custom_call.1} parent=59 // pred_fallthru
          _
        // Predicated region
        $region77: #{tpu_custom_call.1} parent=59 // pred_check
          %p447 = pneg %p173
        $region78: #{tpu_custom_call.1} parent=59 // pred_check_branch
          %449 = sbr.rel (%p447) target = $region80
        $region79: #{tpu_custom_call.1} parent=59 // pred_region
          %450 = dma.done [#allocation10], 8192
        $region80: #{tpu_custom_call.1} parent=59 // pred_fallthru
          _
        // Predicated region
        $region81: #{tpu_custom_call.1} parent=59 // pred_check
          %p451 = pneg %p215
        $region82: #{tpu_custom_call.1} parent=59 // pred_check_branch
          %453 = sbr.rel (%p451) target = $region84
        $region83: #{tpu_custom_call.1} parent=59 // pred_region
          %454 = dma.done [#allocation13], 8192
        $region84: #{tpu_custom_call.1} parent=59 // pred_fallthru
          _
        // Predicated region
        $region85: #{tpu_custom_call.1} parent=59 // pred_check
          %p455 = pneg %p262
        $region86: #{tpu_custom_call.1} parent=59 // pred_check_branch
          %457 = sbr.rel (%p455) target = $region88
        $region87: #{tpu_custom_call.1} parent=59 // pred_region
          %458 = dma.done [#allocation13], 512
        $region88: #{tpu_custom_call.1} parent=59 // pred_fallthru
          _
        %s459 = sand.u32 %s50, 1
        %s460 = scalar_lea.sflag [#allocation4], %s459
        %s461 = sand.u32 %s50, 1
        %s462 = smul.addr %s461, 512
        %s463 = scalar_lea.vmem [#allocation3], %s462
        %p464 = pneg %p63
        %p465 = pneg %p60
        %p466 = pneg %p89
        %p467 = pneg %p86
        %p468 = pneg %p110
        %p469 = pneg %p107
        %p470 = pneg %p131
        %p471 = pneg %p128
        %p472 = pneg %p152
        %p473 = pneg %p149
        %p474 = pneg %p173
        %p475 = pneg %p170
        %p476 = pneg %p194
        %p477 = pneg %p191
        %p478 = pneg %p215
        %p479 = pneg %p212
        %p480 = pneg %p236
        %p481 = pneg %p233
        %p482 = pneg %p262
        %p483 = pneg %p259
        %p484 = pneg %p288
        %p485 = pneg %p285
        %s486 = smul.u32 8, %s32
        %s487 = smul.u32 16, %s33
        %s488 = smul.u32 8, %s32
        %p489 = scmp.eq.s32.totalorder %s33, 0
        // Predicated region
        $region89: #{tpu_custom_call.1} parent=59 // pred_check
          %p490 = pneg %p489
        $region90: #{tpu_custom_call.1} parent=59 // pred_check_branch
          %492 = sbr.rel (%p490) target = $region92
        $region91: #{tpu_custom_call.1} parent=59 // pred_region
          %vm493 = vcmask 64512
          %494 = vst.msk [vmem:[#allocation2] sm:$0xff] %vm493, 0.0
        $region92: #{tpu_custom_call.1} parent=59 // pred_fallthru
          _
        %v495 = vld [vmem:[#allocation2] sm:$0xff]
        %v496 = vld [vmem:[%s430] sm:$0xff]
        %v497 = vld [vmem:[%s430 + $0x8] sm:$0xff]
        %v498 = vld [vmem:[%s430 + $0x10] sm:$0xff]
        %v499 = vld [vmem:[%s430 + $0x18] sm:$0xff]
        %v500 = vld [vmem:[%s430 + $0x20] sm:$0xff]
        %v501 = vld [vmem:[%s430 + $0x28] sm:$0xff]
        %v502 = vld [vmem:[%s430 + $0x30] sm:$0xff]
        %v503 = vld [vmem:[%s430 + $0x38] sm:$0xff]
        %v504 = vld [vmem:[%s430 + $0x40] sm:$0xff]
        %v505 = vld [vmem:[%s430 + $0x48] sm:$0xff]
        %v506 = vld [vmem:[%s430 + $0x50] sm:$0xff]
        %v507 = vld [vmem:[%s430 + $0x58] sm:$0xff]
        %v508 = vld [vmem:[%s430 + $0x60] sm:$0xff]
        %v509 = vld [vmem:[%s430 + $0x68] sm:$0xff]
        %v510 = vld [vmem:[%s430 + $0x70] sm:$0xff]
        %v511 = vld [vmem:[%s430 + $0x78] sm:$0xff]
        %v512 = vld [vmem:[%s430 + $0x80] sm:$0xff]
        %v513 = vld [vmem:[%s430 + $0x88] sm:$0xff]
        %v514 = vld [vmem:[%s430 + $0x90] sm:$0xff]
        %v515 = vld [vmem:[%s430 + $0x98] sm:$0xff]
        %v516 = vld [vmem:[%s430 + $0xa0] sm:$0xff]
        %v517 = vld [vmem:[%s430 + $0xa8] sm:$0xff]
        %v518 = vld [vmem:[%s430 + $0xb0] sm:$0xff]
        %v519 = vld [vmem:[%s430 + $0xb8] sm:$0xff]
        %v520 = vld [vmem:[%s430 + $0xc0] sm:$0xff]
        %v521 = vld [vmem:[%s430 + $0xc8] sm:$0xff]
        %v522 = vld [vmem:[%s430 + $0xd0] sm:$0xff]
        %v523 = vld [vmem:[%s430 + $0xd8] sm:$0xff]
        %v524 = vld [vmem:[%s430 + $0xe0] sm:$0xff]
        %v525 = vld [vmem:[%s430 + $0xe8] sm:$0xff]
        %v526 = vld [vmem:[%s430 + $0xf0] sm:$0xff]
        %v527 = vld [vmem:[%s430 + $0xf8] sm:$0xff]
        %v528 = vld [vmem:[%s430 + $0x100] sm:$0xff]
        %v529 = vld [vmem:[%s430 + $0x108] sm:$0xff]
        %v530 = vld [vmem:[%s430 + $0x110] sm:$0xff]
        %v531 = vld [vmem:[%s430 + $0x118] sm:$0xff]
        %v532 = vld [vmem:[%s430 + $0x120] sm:$0xff]
        %v533 = vld [vmem:[%s430 + $0x128] sm:$0xff]
        %v534 = vld [vmem:[%s430 + $0x130] sm:$0xff]
        %v535 = vld [vmem:[%s430 + $0x138] sm:$0xff]
        %v536 = vld [vmem:[%s430 + $0x140] sm:$0xff]
        %v537 = vld [vmem:[%s430 + $0x148] sm:$0xff]
        %v538 = vld [vmem:[%s430 + $0x150] sm:$0xff]
        %v539 = vld [vmem:[%s430 + $0x158] sm:$0xff]
        %v540 = vld [vmem:[%s430 + $0x160] sm:$0xff]
        %v541 = vld [vmem:[%s430 + $0x168] sm:$0xff]
        %v542 = vld [vmem:[%s430 + $0x170] sm:$0xff]
        %v543 = vld [vmem:[%s430 + $0x178] sm:$0xff]
        %v544 = vld [vmem:[%s430 + $0x180] sm:$0xff]
        %v545 = vld [vmem:[%s430 + $0x188] sm:$0xff]
        %v546 = vld [vmem:[%s430 + $0x190] sm:$0xff]
        %v547 = vld [vmem:[%s430 + $0x198] sm:$0xff]
        %v548 = vld [vmem:[%s430 + $0x1a0] sm:$0xff]
        %v549 = vld [vmem:[%s430 + $0x1a8] sm:$0xff]
        %v550 = vld [vmem:[%s430 + $0x1b0] sm:$0xff]
        %v551 = vld [vmem:[%s430 + $0x1b8] sm:$0xff]
        %v552 = vld [vmem:[%s430 + $0x1c0] sm:$0xff]
        %v553 = vld [vmem:[%s430 + $0x1c8] sm:$0xff]
        %v554 = vld [vmem:[%s430 + $0x1d0] sm:$0xff]
        %v555 = vld [vmem:[%s430 + $0x1d8] sm:$0xff]
        %v556 = vld [vmem:[%s430 + $0x1e0] sm:$0xff]
        %v557 = vld [vmem:[%s430 + $0x1e8] sm:$0xff]
        %v558 = vld [vmem:[%s430 + $0x1f0] sm:$0xff]
        %v559 = vld [vmem:[%s430 + $0x1f8] sm:$0xff]
        %v560 = vunpack.c.l.bf16 %v496
        %v561 = vunpack.c.h.bf16 %v496
        %v562 = vunpack.c.l.bf16 %v497
        %v563 = vunpack.c.h.bf16 %v497
        %v564 = vunpack.c.l.bf16 %v498
        %v565 = vunpack.c.h.bf16 %v498
        %v566 = vunpack.c.l.bf16 %v499
        %v567 = vunpack.c.h.bf16 %v499
        %v568 = vunpack.c.l.bf16 %v500
        %v569 = vunpack.c.h.bf16 %v500
        %v570 = vunpack.c.l.bf16 %v501
        %v571 = vunpack.c.h.bf16 %v501
        %v572 = vunpack.c.l.bf16 %v502
        %v573 = vunpack.c.h.bf16 %v502
        %v574 = vunpack.c.l.bf16 %v503
        %v575 = vunpack.c.h.bf16 %v503
        %v576 = vunpack.c.l.bf16 %v504
        %v577 = vunpack.c.h.bf16 %v504
        %v578 = vunpack.c.l.bf16 %v505
        %v579 = vunpack.c.h.bf16 %v505
        %v580 = vunpack.c.l.bf16 %v506
        %v581 = vunpack.c.h.bf16 %v506
        %v582 = vunpack.c.l.bf16 %v507
        %v583 = vunpack.c.h.bf16 %v507
        %v584 = vunpack.c.l.bf16 %v508
        %v585 = vunpack.c.h.bf16 %v508
        %v586 = vunpack.c.l.bf16 %v509
        %v587 = vunpack.c.h.bf16 %v509
        %v588 = vunpack.c.l.bf16 %v510
        %v589 = vunpack.c.h.bf16 %v510
        %v590 = vunpack.c.l.bf16 %v511
        %v591 = vunpack.c.h.bf16 %v511
        %v592 = vunpack.c.l.bf16 %v512
        %v593 = vunpack.c.h.bf16 %v512
        %v594 = vunpack.c.l.bf16 %v513
        %v595 = vunpack.c.h.bf16 %v513
        %v596 = vunpack.c.l.bf16 %v514
        %v597 = vunpack.c.h.bf16 %v514
        %v598 = vunpack.c.l.bf16 %v515
        %v599 = vunpack.c.h.bf16 %v515
        %v600 = vunpack.c.l.bf16 %v516
        %v601 = vunpack.c.h.bf16 %v516
        %v602 = vunpack.c.l.bf16 %v517
        %v603 = vunpack.c.h.bf16 %v517
        %v604 = vunpack.c.l.bf16 %v518
        %v605 = vunpack.c.h.bf16 %v518
        %v606 = vunpack.c.l.bf16 %v519
        %v607 = vunpack.c.h.bf16 %v519
        %v608 = vunpack.c.l.bf16 %v520
        %v609 = vunpack.c.h.bf16 %v520
        %v610 = vunpack.c.l.bf16 %v521
        %v611 = vunpack.c.h.bf16 %v521
        %v612 = vunpack.c.l.bf16 %v522
        %v613 = vunpack.c.h.bf16 %v522
        %v614 = vunpack.c.l.bf16 %v523
        %v615 = vunpack.c.h.bf16 %v523
        %v616 = vunpack.c.l.bf16 %v524
        %v617 = vunpack.c.h.bf16 %v524
        %v618 = vunpack.c.l.bf16 %v525
        %v619 = vunpack.c.h.bf16 %v525
        %v620 = vunpack.c.l.bf16 %v526
        %v621 = vunpack.c.h.bf16 %v526
        %v622 = vunpack.c.l.bf16 %v527
        %v623 = vunpack.c.h.bf16 %v527
        %v624 = vunpack.c.l.bf16 %v528
        %v625 = vunpack.c.h.bf16 %v528
        %v626 = vunpack.c.l.bf16 %v529
        %v627 = vunpack.c.h.bf16 %v529
        %v628 = vunpack.c.l.bf16 %v530
        %v629 = vunpack.c.h.bf16 %v530
        %v630 = vunpack.c.l.bf16 %v531
        %v631 = vunpack.c.h.bf16 %v531
        %v632 = vunpack.c.l.bf16 %v532
        %v633 = vunpack.c.h.bf16 %v532
        %v634 = vunpack.c.l.bf16 %v533
        %v635 = vunpack.c.h.bf16 %v533
        %v636 = vunpack.c.l.bf16 %v534
        %v637 = vunpack.c.h.bf16 %v534
        %v638 = vunpack.c.l.bf16 %v535
        %v639 = vunpack.c.h.bf16 %v535
        %v640 = vunpack.c.l.bf16 %v536
        %v641 = vunpack.c.h.bf16 %v536
        %v642 = vunpack.c.l.bf16 %v537
        %v643 = vunpack.c.h.bf16 %v537
        %v644 = vunpack.c.l.bf16 %v538
        %v645 = vunpack.c.h.bf16 %v538
        %v646 = vunpack.c.l.bf16 %v539
        %v647 = vunpack.c.h.bf16 %v539
        %v648 = vunpack.c.l.bf16 %v540
        %v649 = vunpack.c.h.bf16 %v540
        %v650 = vunpack.c.l.bf16 %v541
        %v651 = vunpack.c.h.bf16 %v541
        %v652 = vunpack.c.l.bf16 %v542
        %v653 = vunpack.c.h.bf16 %v542
        %v654 = vunpack.c.l.bf16 %v543
        %v655 = vunpack.c.h.bf16 %v543
        %v656 = vunpack.c.l.bf16 %v544
        %v657 = vunpack.c.h.bf16 %v544
        %v658 = vunpack.c.l.bf16 %v545
        %v659 = vunpack.c.h.bf16 %v545
        %v660 = vunpack.c.l.bf16 %v546
        %v661 = vunpack.c.h.bf16 %v546
        %v662 = vunpack.c.l.bf16 %v547
        %v663 = vunpack.c.h.bf16 %v547
        %v664 = vunpack.c.l.bf16 %v548
        %v665 = vunpack.c.h.bf16 %v548
        %v666 = vunpack.c.l.bf16 %v549
        %v667 = vunpack.c.h.bf16 %v549
        %v668 = vunpack.c.l.bf16 %v550
        %v669 = vunpack.c.h.bf16 %v550
        %v670 = vunpack.c.l.bf16 %v551
        %v671 = vunpack.c.h.bf16 %v551
        %v672 = vunpack.c.l.bf16 %v552
        %v673 = vunpack.c.h.bf16 %v552
        %v674 = vunpack.c.l.bf16 %v553
        %v675 = vunpack.c.h.bf16 %v553
        %v676 = vunpack.c.l.bf16 %v554
        %v677 = vunpack.c.h.bf16 %v554
        %v678 = vunpack.c.l.bf16 %v555
        %v679 = vunpack.c.h.bf16 %v555
        %v680 = vunpack.c.l.bf16 %v556
        %v681 = vunpack.c.h.bf16 %v556
        %v682 = vunpack.c.l.bf16 %v557
        %v683 = vunpack.c.h.bf16 %v557
        %v684 = vunpack.c.l.bf16 %v558
        %v685 = vunpack.c.h.bf16 %v558
        %v686 = vunpack.c.l.bf16 %v559
        %v687 = vunpack.c.h.bf16 %v559
        %v688 = vadd.f32 %v560, %v561
        %v689 = vadd.f32 %v688, %v562
        %v690 = vadd.f32 %v689, %v563
        %v691 = vadd.f32 %v690, %v564
        %v692 = vadd.f32 %v691, %v565
        %v693 = vadd.f32 %v692, %v566
        %v694 = vadd.f32 %v693, %v567
        %v695 = vadd.f32 %v694, %v568
        %v696 = vadd.f32 %v695, %v569
        %v697 = vadd.f32 %v696, %v570
        %v698 = vadd.f32 %v697, %v571
        %v699 = vadd.f32 %v698, %v572
        %v700 = vadd.f32 %v699, %v573
        %v701 = vadd.f32 %v700, %v574
        %v702 = vadd.f32 %v701, %v575
        %703 = vadd.xlane.f32.xlu0 %v702
        %v704 = vpop.xlane.xlu0 %703
        %v705 = vadd.f32 %v576, %v577
        %v706 = vadd.f32 %v705, %v578
        %v707 = vadd.f32 %v706, %v579
        %v708 = vadd.f32 %v707, %v580
        %v709 = vadd.f32 %v708, %v581
        %v710 = vadd.f32 %v709, %v582
        %v711 = vadd.f32 %v710, %v583
        %v712 = vadd.f32 %v711, %v584
        %v713 = vadd.f32 %v712, %v585
        %v714 = vadd.f32 %v713, %v586
        %v715 = vadd.f32 %v714, %v587
        %v716 = vadd.f32 %v715, %v588
        %v717 = vadd.f32 %v716, %v589
        %v718 = vadd.f32 %v717, %v590
        %v719 = vadd.f32 %v718, %v591
        %720 = vadd.xlane.f32.xlu0 %v719
        %v721 = vpop.xlane.xlu0 %720
        %v722 = vadd.f32 %v592, %v593
        %v723 = vadd.f32 %v722, %v594
        %v724 = vadd.f32 %v723, %v595
        %v725 = vadd.f32 %v724, %v596
        %v726 = vadd.f32 %v725, %v597
        %v727 = vadd.f32 %v726, %v598
        %v728 = vadd.f32 %v727, %v599
        %v729 = vadd.f32 %v728, %v600
        %v730 = vadd.f32 %v729, %v601
        %v731 = vadd.f32 %v730, %v602
        %v732 = vadd.f32 %v731, %v603
        %v733 = vadd.f32 %v732, %v604
        %v734 = vadd.f32 %v733, %v605
        %v735 = vadd.f32 %v734, %v606
        %v736 = vadd.f32 %v735, %v607
        %737 = vadd.xlane.f32.xlu0 %v736
        %v738 = vpop.xlane.xlu0 %737
        %v739 = vadd.f32 %v608, %v609
        %v740 = vadd.f32 %v739, %v610
        %v741 = vadd.f32 %v740, %v611
        %v742 = vadd.f32 %v741, %v612
        %v743 = vadd.f32 %v742, %v613
        %v744 = vadd.f32 %v743, %v614
        %v745 = vadd.f32 %v744, %v615
        %v746 = vadd.f32 %v745, %v616
        %v747 = vadd.f32 %v746, %v617
        %v748 = vadd.f32 %v747, %v618
        %v749 = vadd.f32 %v748, %v619
        %v750 = vadd.f32 %v749, %v620
        %v751 = vadd.f32 %v750, %v621
        %v752 = vadd.f32 %v751, %v622
        %v753 = vadd.f32 %v752, %v623
        %754 = vadd.xlane.f32.xlu0 %v753
        %v755 = vpop.xlane.xlu0 %754
        %v756 = vadd.f32 %v624, %v625
        %v757 = vadd.f32 %v756, %v626
        %v758 = vadd.f32 %v757, %v627
        %v759 = vadd.f32 %v758, %v628
        %v760 = vadd.f32 %v759, %v629
        %v761 = vadd.f32 %v760, %v630
        %v762 = vadd.f32 %v761, %v631
        %v763 = vadd.f32 %v762, %v632
        %v764 = vadd.f32 %v763, %v633
        %v765 = vadd.f32 %v764, %v634
        %v766 = vadd.f32 %v765, %v635
        %v767 = vadd.f32 %v766, %v636
        %v768 = vadd.f32 %v767, %v637
        %v769 = vadd.f32 %v768, %v638
        %v770 = vadd.f32 %v769, %v639
        %771 = vadd.xlane.f32.xlu0 %v770
        %v772 = vpop.xlane.xlu0 %771
        %v773 = vadd.f32 %v640, %v641
        %v774 = vadd.f32 %v773, %v642
        %v775 = vadd.f32 %v774, %v643
        %v776 = vadd.f32 %v775, %v644
        %v777 = vadd.f32 %v776, %v645
        %v778 = vadd.f32 %v777, %v646
        %v779 = vadd.f32 %v778, %v647
        %v780 = vadd.f32 %v779, %v648
        %v781 = vadd.f32 %v780, %v649
        %v782 = vadd.f32 %v781, %v650
        %v783 = vadd.f32 %v782, %v651
        %v784 = vadd.f32 %v783, %v652
        %v785 = vadd.f32 %v784, %v653
        %v786 = vadd.f32 %v785, %v654
        %v787 = vadd.f32 %v786, %v655
        %788 = vadd.xlane.f32.xlu0 %v787
        %v789 = vpop.xlane.xlu0 %788
        %v790 = vadd.f32 %v656, %v657
        %v791 = vadd.f32 %v790, %v658
        %v792 = vadd.f32 %v791, %v659
        %v793 = vadd.f32 %v792, %v660
        %v794 = vadd.f32 %v793, %v661
        %v795 = vadd.f32 %v794, %v662
        %v796 = vadd.f32 %v795, %v663
        %v797 = vadd.f32 %v796, %v664
        %v798 = vadd.f32 %v797, %v665
        %v799 = vadd.f32 %v798, %v666
        %v800 = vadd.f32 %v799, %v667
        %v801 = vadd.f32 %v800, %v668
        %v802 = vadd.f32 %v801, %v669
        %v803 = vadd.f32 %v802, %v670
        %v804 = vadd.f32 %v803, %v671
        %805 = vadd.xlane.f32.xlu0 %v804
        %v806 = vpop.xlane.xlu0 %805
        %v807 = vadd.f32 %v672, %v673
        %v808 = vadd.f32 %v807, %v674
        %v809 = vadd.f32 %v808, %v675
        %v810 = vadd.f32 %v809, %v676
        %v811 = vadd.f32 %v810, %v677
        %v812 = vadd.f32 %v811, %v678
        %v813 = vadd.f32 %v812, %v679
        %v814 = vadd.f32 %v813, %v680
        %v815 = vadd.f32 %v814, %v681
        %v816 = vadd.f32 %v815, %v682
        %v817 = vadd.f32 %v816, %v683
        %v818 = vadd.f32 %v817, %v684
        %v819 = vadd.f32 %v818, %v685
        %v820 = vadd.f32 %v819, %v686
        %v821 = vadd.f32 %v820, %v687
        %822 = vadd.xlane.f32.xlu0 %v821
        %v823 = vpop.xlane.xlu0 %822
        %v832 = vlaneseq
        %v833 = vand.u32 %v832, 127
        %v834 = vlaneseq
        %v835 = vshrl.u32 %v834, 7
        %v836 = vsub.s32 %v833, %v835
        %v837 = vrot.slane %v704, %v836
        %v838 = vlaneseq
        %v839 = vshrl.u32 %v838, 7
        %v840 = vsub.s32 %v833, %v839
        %v841 = vrot.slane %v721, %v840
        %v842 = vlaneseq
        %v843 = vshrl.u32 %v842, 7
        %v844 = vsub.s32 %v833, %v843
        %v845 = vrot.slane %v738, %v844
        %v846 = vlaneseq
        %v847 = vshrl.u32 %v846, 7
        %v848 = vsub.s32 %v833, %v847
        %v849 = vrot.slane %v755, %v848
        %v850 = vlaneseq
        %v851 = vshrl.u32 %v850, 7
        %v852 = vsub.s32 %v833, %v851
        %v853 = vrot.slane %v772, %v852
        %v854 = vlaneseq
        %v855 = vshrl.u32 %v854, 7
        %v856 = vsub.s32 %v833, %v855
        %v857 = vrot.slane %v789, %v856
        %v858 = vlaneseq
        %v859 = vshrl.u32 %v858, 7
        %v860 = vsub.s32 %v833, %v859
        %v861 = vrot.slane %v806, %v860
        %v862 = vlaneseq
        %v863 = vshrl.u32 %v862, 7
        %v864 = vsub.s32 %v833, %v863
        %v865 = vrot.slane %v823, %v864
        %vm866 = vcmask 1041409
        %v867 = vsel %vm866, %v841, %v837
        %vm868 = vcmask 1042434
        %v869 = vsel %vm868, %v845, %v867
        %vm870 = vcmask 1043459
        %v871 = vsel %vm870, %v849, %v869
        %vm872 = vcmask 1044484
        %v873 = vsel %vm872, %v853, %v871
        %vm874 = vcmask 1045509
        %v875 = vsel %vm874, %v857, %v873
        %vm876 = vcmask 1046534
        %v877 = vsel %vm876, %v861, %v875
        %vm878 = vcmask 1047559
        %v879 = vsel %vm878, %v865, %v877
        %v881 = vadd.f32 %v495, %v879
        %vm882 = vcmask 64512
        %883 = vst.msk [vmem:[#allocation2] sm:$0xff] %vm882, %v881
        %p884 = scmp.eq.s32.totalorder %s33, 1
        // Predicated region
        $region93: #{tpu_custom_call.1} parent=59 // pred_check
          %p885 = pneg %p884
        $region94: #{tpu_custom_call.1} parent=59 // pred_check_branch
          %887 = sbr.rel (%p885) target = $region96
        $region95: #{tpu_custom_call.1} parent=59 // pred_region
          %v888 = vld [vmem:[#allocation2] sm:$0xff]
          %v889 = vld [vmem:[#allocation6] sm:$0xff]
          %v890 = vld [vmem:[#allocation6 + $0x8] sm:$0xff]
          %v891 = vld [vmem:[#allocation6 + $0x10] sm:$0xff]
          %v892 = vld [vmem:[#allocation6 + $0x18] sm:$0xff]
          %v893 = vld [vmem:[#allocation6 + $0x20] sm:$0xff]
          %v894 = vld [vmem:[#allocation6 + $0x28] sm:$0xff]
          %v895 = vld [vmem:[#allocation6 + $0x30] sm:$0xff]
          %v896 = vld [vmem:[#allocation6 + $0x38] sm:$0xff]
          %v897 = vld [vmem:[#allocation6 + $0x40] sm:$0xff]
          %v898 = vld [vmem:[#allocation6 + $0x48] sm:$0xff]
          %v899 = vld [vmem:[#allocation6 + $0x50] sm:$0xff]
          %v900 = vld [vmem:[#allocation6 + $0x58] sm:$0xff]
          %v901 = vld [vmem:[#allocation6 + $0x60] sm:$0xff]
          %v902 = vld [vmem:[#allocation6 + $0x68] sm:$0xff]
          %v903 = vld [vmem:[#allocation6 + $0x70] sm:$0xff]
          %v904 = vld [vmem:[#allocation6 + $0x78] sm:$0xff]
          %v905 = vld [vmem:[#allocation6 + $0x80] sm:$0xff]
          %v906 = vld [vmem:[#allocation6 + $0x88] sm:$0xff]
          %v907 = vld [vmem:[#allocation6 + $0x90] sm:$0xff]
          %v908 = vld [vmem:[#allocation6 + $0x98] sm:$0xff]
          %v909 = vld [vmem:[#allocation6 + $0xa0] sm:$0xff]
          %v910 = vld [vmem:[#allocation6 + $0xa8] sm:$0xff]
          %v911 = vld [vmem:[#allocation6 + $0xb0] sm:$0xff]
          %v912 = vld [vmem:[#allocation6 + $0xb8] sm:$0xff]
          %v913 = vld [vmem:[#allocation6 + $0xc0] sm:$0xff]
          %v914 = vld [vmem:[#allocation6 + $0xc8] sm:$0xff]
          %v915 = vld [vmem:[#allocation6 + $0xd0] sm:$0xff]
          %v916 = vld [vmem:[#allocation6 + $0xd8] sm:$0xff]
          %v917 = vld [vmem:[#allocation6 + $0xe0] sm:$0xff]
          %v918 = vld [vmem:[#allocation6 + $0xe8] sm:$0xff]
          %v919 = vld [vmem:[#allocation6 + $0xf0] sm:$0xff]
          %v920 = vld [vmem:[#allocation6 + $0xf8] sm:$0xff]
          %v921 = vunpack.c.l.bf16 %v889
          %v922 = vunpack.c.h.bf16 %v889
          %v923 = vunpack.c.l.bf16 %v890
          %v924 = vunpack.c.h.bf16 %v890
          %v925 = vunpack.c.l.bf16 %v891
          %v926 = vunpack.c.h.bf16 %v891
          %v927 = vunpack.c.l.bf16 %v892
          %v928 = vunpack.c.h.bf16 %v892
          %v929 = vunpack.c.l.bf16 %v893
          %v930 = vunpack.c.h.bf16 %v893
          %v931 = vunpack.c.l.bf16 %v894
          %v932 = vunpack.c.h.bf16 %v894
          %v933 = vunpack.c.l.bf16 %v895
          %v934 = vunpack.c.h.bf16 %v895
          %v935 = vunpack.c.l.bf16 %v896
          %v936 = vunpack.c.h.bf16 %v896
          %v937 = vunpack.c.l.bf16 %v897
          %v938 = vunpack.c.h.bf16 %v897
          %v939 = vunpack.c.l.bf16 %v898
          %v940 = vunpack.c.h.bf16 %v898
          %v941 = vunpack.c.l.bf16 %v899
          %v942 = vunpack.c.h.bf16 %v899
          %v943 = vunpack.c.l.bf16 %v900
          %v944 = vunpack.c.h.bf16 %v900
          %v945 = vunpack.c.l.bf16 %v901
          %v946 = vunpack.c.h.bf16 %v901
          %v947 = vunpack.c.l.bf16 %v902
          %v948 = vunpack.c.h.bf16 %v902
          %v949 = vunpack.c.l.bf16 %v903
          %v950 = vunpack.c.h.bf16 %v903
          %v951 = vunpack.c.l.bf16 %v904
          %v952 = vunpack.c.h.bf16 %v904
          %v953 = vunpack.c.l.bf16 %v905
          %v954 = vunpack.c.h.bf16 %v905
          %v955 = vunpack.c.l.bf16 %v906
          %v956 = vunpack.c.h.bf16 %v906
          %v957 = vunpack.c.l.bf16 %v907
          %v958 = vunpack.c.h.bf16 %v907
          %v959 = vunpack.c.l.bf16 %v908
          %v960 = vunpack.c.h.bf16 %v908
          %v961 = vunpack.c.l.bf16 %v909
          %v962 = vunpack.c.h.bf16 %v909
          %v963 = vunpack.c.l.bf16 %v910
          %v964 = vunpack.c.h.bf16 %v910
          %v965 = vunpack.c.l.bf16 %v911
          %v966 = vunpack.c.h.bf16 %v911
          %v967 = vunpack.c.l.bf16 %v912
          %v968 = vunpack.c.h.bf16 %v912
          %v969 = vunpack.c.l.bf16 %v913
          %v970 = vunpack.c.h.bf16 %v913
          %v971 = vunpack.c.l.bf16 %v914
          %v972 = vunpack.c.h.bf16 %v914
          %v973 = vunpack.c.l.bf16 %v915
          %v974 = vunpack.c.h.bf16 %v915
          %v975 = vunpack.c.l.bf16 %v916
          %v976 = vunpack.c.h.bf16 %v916
          %v977 = vunpack.c.l.bf16 %v917
          %v978 = vunpack.c.h.bf16 %v917
          %v979 = vunpack.c.l.bf16 %v918
          %v980 = vunpack.c.h.bf16 %v918
          %v981 = vunpack.c.l.bf16 %v919
          %v982 = vunpack.c.h.bf16 %v919
          %v983 = vunpack.c.l.bf16 %v920
          %v984 = vunpack.c.h.bf16 %v920
          %v985 = vadd.f32 %v921, %v922
          %v986 = vadd.f32 %v985, %v923
          %v987 = vadd.f32 %v986, %v924
          %v988 = vadd.f32 %v987, %v925
          %v989 = vadd.f32 %v988, %v926
          %v990 = vadd.f32 %v989, %v927
          %v991 = vadd.f32 %v990, %v928
          %992 = vadd.xlane.f32.xlu0 %v991
          %v993 = vpop.xlane.xlu0 %992
          %v994 = vadd.f32 %v929, %v930
          %v995 = vadd.f32 %v994, %v931
          %v996 = vadd.f32 %v995, %v932
          %v997 = vadd.f32 %v996, %v933
          %v998 = vadd.f32 %v997, %v934
          %v999 = vadd.f32 %v998, %v935
          %v1000 = vadd.f32 %v999, %v936
          %1001 = vadd.xlane.f32.xlu0 %v1000
          %v1002 = vpop.xlane.xlu0 %1001
          %v1003 = vadd.f32 %v937, %v938
          %v1004 = vadd.f32 %v1003, %v939
          %v1005 = vadd.f32 %v1004, %v940
          %v1006 = vadd.f32 %v1005, %v941
          %v1007 = vadd.f32 %v1006, %v942
          %v1008 = vadd.f32 %v1007, %v943
          %v1009 = vadd.f32 %v1008, %v944
          %1010 = vadd.xlane.f32.xlu0 %v1009
          %v1011 = vpop.xlane.xlu0 %1010
          %v1012 = vadd.f32 %v945, %v946
          %v1013 = vadd.f32 %v1012, %v947
          %v1014 = vadd.f32 %v1013, %v948
          %v1015 = vadd.f32 %v1014, %v949
          %v1016 = vadd.f32 %v1015, %v950
          %v1017 = vadd.f32 %v1016, %v951
          %v1018 = vadd.f32 %v1017, %v952
          %1019 = vadd.xlane.f32.xlu0 %v1018
          %v1020 = vpop.xlane.xlu0 %1019
          %v1021 = vadd.f32 %v953, %v954
          %v1022 = vadd.f32 %v1021, %v955
          %v1023 = vadd.f32 %v1022, %v956
          %v1024 = vadd.f32 %v1023, %v957
          %v1025 = vadd.f32 %v1024, %v958
          %v1026 = vadd.f32 %v1025, %v959
          %v1027 = vadd.f32 %v1026, %v960
          %1028 = vadd.xlane.f32.xlu0 %v1027
          %v1029 = vpop.xlane.xlu0 %1028
          %v1030 = vadd.f32 %v961, %v962
          %v1031 = vadd.f32 %v1030, %v963
          %v1032 = vadd.f32 %v1031, %v964
          %v1033 = vadd.f32 %v1032, %v965
          %v1034 = vadd.f32 %v1033, %v966
          %v1035 = vadd.f32 %v1034, %v967
          %v1036 = vadd.f32 %v1035, %v968
          %1037 = vadd.xlane.f32.xlu0 %v1036
          %v1038 = vpop.xlane.xlu0 %1037
          %v1039 = vadd.f32 %v969, %v970
          %v1040 = vadd.f32 %v1039, %v971
          %v1041 = vadd.f32 %v1040, %v972
          %v1042 = vadd.f32 %v1041, %v973
          %v1043 = vadd.f32 %v1042, %v974
          %v1044 = vadd.f32 %v1043, %v975
          %v1045 = vadd.f32 %v1044, %v976
          %1046 = vadd.xlane.f32.xlu0 %v1045
          %v1047 = vpop.xlane.xlu0 %1046
          %v1048 = vadd.f32 %v977, %v978
          %v1049 = vadd.f32 %v1048, %v979
          %v1050 = vadd.f32 %v1049, %v980
          %v1051 = vadd.f32 %v1050, %v981
          %v1052 = vadd.f32 %v1051, %v982
          %v1053 = vadd.f32 %v1052, %v983
          %v1054 = vadd.f32 %v1053, %v984
          %1055 = vadd.xlane.f32.xlu0 %v1054
          %v1056 = vpop.xlane.xlu0 %1055
          %v1057 = vld [vmem:[#allocation8] sm:$0xff]
          %v1058 = vld [vmem:[#allocation9] sm:$0xff]
          %v1067 = vlaneseq
          %v1068 = vshrl.u32 %v1067, 7
          %v1069 = vsub.s32 %v833, %v1068
          %v1070 = vrot.slane %v993, %v1069
          %v1071 = vlaneseq
          %v1072 = vshrl.u32 %v1071, 7
          %v1073 = vsub.s32 %v833, %v1072
          %v1074 = vrot.slane %v1002, %v1073
          %v1075 = vlaneseq
          %v1076 = vshrl.u32 %v1075, 7
          %v1077 = vsub.s32 %v833, %v1076
          %v1078 = vrot.slane %v1011, %v1077
          %v1079 = vlaneseq
          %v1080 = vshrl.u32 %v1079, 7
          %v1081 = vsub.s32 %v833, %v1080
          %v1082 = vrot.slane %v1020, %v1081
          %v1083 = vlaneseq
          %v1084 = vshrl.u32 %v1083, 7
          %v1085 = vsub.s32 %v833, %v1084
          %v1086 = vrot.slane %v1029, %v1085
          %v1087 = vlaneseq
          %v1088 = vshrl.u32 %v1087, 7
          %v1089 = vsub.s32 %v833, %v1088
          %v1090 = vrot.slane %v1038, %v1089
          %v1091 = vlaneseq
          %v1092 = vshrl.u32 %v1091, 7
          %v1093 = vsub.s32 %v833, %v1092
          %v1094 = vrot.slane %v1047, %v1093
          %v1095 = vlaneseq
          %v1096 = vshrl.u32 %v1095, 7
          %v1097 = vsub.s32 %v833, %v1096
          %v1098 = vrot.slane %v1056, %v1097
          %v1099 = vsel %vm866, %v1074, %v1070
          %v1100 = vsel %vm868, %v1078, %v1099
          %v1101 = vsel %vm870, %v1082, %v1100
          %v1102 = vsel %vm872, %v1086, %v1101
          %v1103 = vsel %vm874, %v1090, %v1102
          %v1104 = vsel %vm876, %v1094, %v1103
          %v1105 = vsel %vm878, %v1098, %v1104
          %v1106 = vsel %vm882, %v1105, 0
          %1108 = vmatprep.subr.mxu0 0.0
          %1109 = vmatpush1.msra.mxu0 0.0
          %1110 = vmatprep.subr.mxu0 0.0
          %1111 = vmatpush1.msra.mxu0 0.0
          %1112 = vmatprep.subr.mxu0 0.0
          %1113 = vmatpush1.msra.mxu0 0.0
          %1114 = vmatprep.subr.mxu0 0.0
          %1115 = vmatpush1.msra.mxu0 0.0
          %1116 = vmatprep.subr.mxu0 0.0
          %1117 = vmatpush1.msra.mxu0 0.0
          %1118 = vmatprep.subr.mxu0 0.0
          %1119 = vmatpush1.msra.mxu0 0.0
          %1120 = vmatprep.subr.mxu0 0.0
          %1121 = vmatpush1.msra.mxu0 0.0
          %1122 = vmatprep.subr.mxu0 0.0
          %1123 = vmatpush1.msra.mxu0 0.0
          %1124 = vmatprep.subr.mxu0 0.0
          %1125 = vmatpush1.msra.mxu0 0.0
          %1126 = vmatprep.subr.mxu0 0.0
          %1127 = vmatpush1.msra.mxu0 0.0
          %1128 = vmatprep.subr.mxu0 0.0
          %1129 = vmatpush1.msra.mxu0 0.0
          %1130 = vmatprep.subr.mxu0 0.0
          %1131 = vmatpush1.msra.mxu0 0.0
          %1132 = vmatprep.subr.mxu0 0.0
          %1133 = vmatpush1.msra.mxu0 0.0
          %1134 = vmatprep.subr.mxu0 0.0
          %1135 = vmatpush1.msra.mxu0 0.0
          %1136 = vmatprep.subr.mxu0 0.0
          %1137 = vmatpush1.msra.mxu0 0.0
          %1138 = vmatprep.subr.mxu0 0.0
          %1139 = vmatpush1.msra.mxu0 %v1058
          %1140 = vmatprep.subr.mxu0 0.0
          %1141 = vmatpush2.msra.mxu0 0.0
          %1142 = vmatprep.subr.mxu0 0.0
          %1143 = vmatpush2.msra.mxu0 0.0
          %1144 = vmatprep.subr.mxu0 0.0
          %1145 = vmatpush2.msra.mxu0 0.0
          %1146 = vmatprep.subr.mxu0 0.0
          %1147 = vmatpush2.msra.mxu0 0.0
          %1148 = vmatprep.subr.mxu0 0.0
          %1149 = vmatpush2.msra.mxu0 0.0
          %1150 = vmatprep.subr.mxu0 0.0
          %1151 = vmatpush2.msra.mxu0 0.0
          %1152 = vmatprep.subr.mxu0 0.0
          %1153 = vmatpush2.msra.mxu0 0.0
          %1154 = vmatprep.subr.mxu0 0.0
          %1155 = vmatpush2.msra.mxu0 0.0
          %1156 = vmatprep.subr.mxu0 0.0
          %1157 = vmatpush2.msra.mxu0 0.0
          %1158 = vmatprep.subr.mxu0 0.0
          %1159 = vmatpush2.msra.mxu0 0.0
          %1160 = vmatprep.subr.mxu0 0.0
          %1161 = vmatpush2.msra.mxu0 0.0
          %1162 = vmatprep.subr.mxu0 0.0
          %1163 = vmatpush2.msra.mxu0 0.0
          %1164 = vmatprep.subr.mxu0 0.0
          %1165 = vmatpush2.msra.mxu0 0.0
          %1166 = vmatprep.subr.mxu0 0.0
          %1167 = vmatpush2.msra.mxu0 0.0
          %1168 = vmatprep.subr.mxu0 0.0
          %1169 = vmatpush2.msra.mxu0 0.0
          %1170 = vmatprep.subr.mxu0 0.0
          %1171 = vmatpush2.msra.mxu0 0.0
          %1172 = vmatprep.mubr.f32.mxu0 0.0
          %1173 = vmatmul.mubr.f32.gmra.mxu0 %v1106
          %v1174 = vpop.f32.mrf.mxu0
          %v1175 = vadd.f32 0.0, %v1174
          %v1176 = vpop.f32.mrf.mxu0
          %1177 = vdwg.mxu0
          %v1179 = vsel %vm882, %v888, 0
          %1181 = vmatprep.subr.mxu0 0.0
          %1182 = vmatpush1.msra.mxu0 0.0
          %1183 = vmatprep.subr.mxu0 0.0
          %1184 = vmatpush1.msra.mxu0 0.0
          %1185 = vmatprep.subr.mxu0 0.0
          %1186 = vmatpush1.msra.mxu0 0.0
          %1187 = vmatprep.subr.mxu0 0.0
          %1188 = vmatpush1.msra.mxu0 0.0
          %1189 = vmatprep.subr.mxu0 0.0
          %1190 = vmatpush1.msra.mxu0 0.0
          %1191 = vmatprep.subr.mxu0 0.0
          %1192 = vmatpush1.msra.mxu0 0.0
          %1193 = vmatprep.subr.mxu0 0.0
          %1194 = vmatpush1.msra.mxu0 0.0
          %1195 = vmatprep.subr.mxu0 0.0
          %1196 = vmatpush1.msra.mxu0 0.0
          %1197 = vmatprep.subr.mxu0 0.0
          %1198 = vmatpush1.msra.mxu0 0.0
          %1199 = vmatprep.subr.mxu0 0.0
          %1200 = vmatpush1.msra.mxu0 0.0
          %1201 = vmatprep.subr.mxu0 0.0
          %1202 = vmatpush1.msra.mxu0 0.0
          %1203 = vmatprep.subr.mxu0 0.0
          %1204 = vmatpush1.msra.mxu0 0.0
          %1205 = vmatprep.subr.mxu0 0.0
          %1206 = vmatpush1.msra.mxu0 0.0
          %1207 = vmatprep.subr.mxu0 0.0
          %1208 = vmatpush1.msra.mxu0 0.0
          %1209 = vmatprep.subr.mxu0 0.0
          %1210 = vmatpush1.msra.mxu0 0.0
          %1211 = vmatprep.subr.mxu0 0.0
          %1212 = vmatpush1.msra.mxu0 %v1057
          %1213 = vmatprep.subr.mxu0 0.0
          %1214 = vmatpush2.msra.mxu0 0.0
          %1215 = vmatprep.subr.mxu0 0.0
          %1216 = vmatpush2.msra.mxu0 0.0
          %1217 = vmatprep.subr.mxu0 0.0
          %1218 = vmatpush2.msra.mxu0 0.0
          %1219 = vmatprep.subr.mxu0 0.0
          %1220 = vmatpush2.msra.mxu0 0.0
          %1221 = vmatprep.subr.mxu0 0.0
          %1222 = vmatpush2.msra.mxu0 0.0
          %1223 = vmatprep.subr.mxu0 0.0
          %1224 = vmatpush2.msra.mxu0 0.0
          %1225 = vmatprep.subr.mxu0 0.0
          %1226 = vmatpush2.msra.mxu0 0.0
          %1227 = vmatprep.subr.mxu0 0.0
          %1228 = vmatpush2.msra.mxu0 0.0
          %1229 = vmatprep.subr.mxu0 0.0
          %1230 = vmatpush2.msra.mxu0 0.0
          %1231 = vmatprep.subr.mxu0 0.0
          %1232 = vmatpush2.msra.mxu0 0.0
          %1233 = vmatprep.subr.mxu0 0.0
          %1234 = vmatpush2.msra.mxu0 0.0
          %1235 = vmatprep.subr.mxu0 0.0
          %1236 = vmatpush2.msra.mxu0 0.0
          %1237 = vmatprep.subr.mxu0 0.0
          %1238 = vmatpush2.msra.mxu0 0.0
          %1239 = vmatprep.subr.mxu0 0.0
          %1240 = vmatpush2.msra.mxu0 0.0
          %1241 = vmatprep.subr.mxu0 0.0
          %1242 = vmatpush2.msra.mxu0 0.0
          %1243 = vmatprep.subr.mxu0 0.0
          %1244 = vmatpush2.msra.mxu0 0.0
          %1245 = vmatprep.mubr.f32.mxu0 0.0
          %1246 = vmatmul.mubr.f32.gmra.mxu0 %v1179
          %v1247 = vpop.f32.mrf.mxu0
          %v1248 = vadd.f32 %v1175, %v1247
          %v1249 = vpop.f32.mrf.mxu0
          %1250 = vdwg.mxu0
          %v1251 = vld [vmem:[%s4] sm:$0x1]
          %v1253 = vlaneseq
          %v1254 = vshrl.u32 %v1253, 7
          %v1255 = vsub.s32 0, %v1254
          %v1256 = vrot.slane %v1251, %v1255
          %v1258 = vadd.f32 %v1248, %v1256
          %v1259 = vmax.f32 %v1258, 0.0
          %v1260 = vld [vmem:[#allocation11] sm:$0xff]
          %v1261 = vld [vmem:[#allocation11 + $0x8] sm:$0xff]
          %v1262 = vld [vmem:[#allocation11 + $0x10] sm:$0xff]
          %v1263 = vld [vmem:[#allocation11 + $0x18] sm:$0xff]
          %v1264 = vld [vmem:[#allocation11 + $0x20] sm:$0xff]
          %v1265 = vld [vmem:[#allocation11 + $0x28] sm:$0xff]
          %v1266 = vld [vmem:[#allocation11 + $0x30] sm:$0xff]
          %v1267 = vld [vmem:[#allocation11 + $0x38] sm:$0xff]
          %v1268 = vld [vmem:[#allocation11 + $0x40] sm:$0xff]
          %v1269 = vld [vmem:[#allocation11 + $0x48] sm:$0xff]
          %v1270 = vld [vmem:[#allocation11 + $0x50] sm:$0xff]
          %v1271 = vld [vmem:[#allocation11 + $0x58] sm:$0xff]
          %v1272 = vld [vmem:[#allocation11 + $0x60] sm:$0xff]
          %v1273 = vld [vmem:[#allocation11 + $0x68] sm:$0xff]
          %v1274 = vld [vmem:[#allocation11 + $0x70] sm:$0xff]
          %v1275 = vld [vmem:[#allocation11 + $0x78] sm:$0xff]
          %v1276 = vld [vmem:[#allocation11 + $0x80] sm:$0xff]
          %v1277 = vld [vmem:[#allocation11 + $0x88] sm:$0xff]
          %v1278 = vld [vmem:[#allocation11 + $0x90] sm:$0xff]
          %v1279 = vld [vmem:[#allocation11 + $0x98] sm:$0xff]
          %v1280 = vld [vmem:[#allocation11 + $0xa0] sm:$0xff]
          %v1281 = vld [vmem:[#allocation11 + $0xa8] sm:$0xff]
          %v1282 = vld [vmem:[#allocation11 + $0xb0] sm:$0xff]
          %v1283 = vld [vmem:[#allocation11 + $0xb8] sm:$0xff]
          %v1284 = vld [vmem:[#allocation11 + $0xc0] sm:$0xff]
          %v1285 = vld [vmem:[#allocation11 + $0xc8] sm:$0xff]
          %v1286 = vld [vmem:[#allocation11 + $0xd0] sm:$0xff]
          %v1287 = vld [vmem:[#allocation11 + $0xd8] sm:$0xff]
          %v1288 = vld [vmem:[#allocation11 + $0xe0] sm:$0xff]
          %v1289 = vld [vmem:[#allocation11 + $0xe8] sm:$0xff]
          %v1290 = vld [vmem:[#allocation11 + $0xf0] sm:$0xff]
          %v1291 = vld [vmem:[#allocation11 + $0xf8] sm:$0xff]
          %v1292 = vld [vmem:[#allocation11 + $0x100] sm:$0xff]
          %v1293 = vld [vmem:[#allocation11 + $0x108] sm:$0xff]
          %v1294 = vld [vmem:[#allocation11 + $0x110] sm:$0xff]
          %v1295 = vld [vmem:[#allocation11 + $0x118] sm:$0xff]
          %v1296 = vld [vmem:[#allocation11 + $0x120] sm:$0xff]
          %v1297 = vld [vmem:[#allocation11 + $0x128] sm:$0xff]
          %v1298 = vld [vmem:[#allocation11 + $0x130] sm:$0xff]
          %v1299 = vld [vmem:[#allocation11 + $0x138] sm:$0xff]
          %v1300 = vld [vmem:[#allocation11 + $0x140] sm:$0xff]
          %v1301 = vld [vmem:[#allocation11 + $0x148] sm:$0xff]
          %v1302 = vld [vmem:[#allocation11 + $0x150] sm:$0xff]
          %v1303 = vld [vmem:[#allocation11 + $0x158] sm:$0xff]
          %v1304 = vld [vmem:[#allocation11 + $0x160] sm:$0xff]
          %v1305 = vld [vmem:[#allocation11 + $0x168] sm:$0xff]
          %v1306 = vld [vmem:[#allocation11 + $0x170] sm:$0xff]
          %v1307 = vld [vmem:[#allocation11 + $0x178] sm:$0xff]
          %v1308 = vld [vmem:[#allocation11 + $0x180] sm:$0xff]
          %v1309 = vld [vmem:[#allocation11 + $0x188] sm:$0xff]
          %v1310 = vld [vmem:[#allocation11 + $0x190] sm:$0xff]
          %v1311 = vld [vmem:[#allocation11 + $0x198] sm:$0xff]
          %v1312 = vld [vmem:[#allocation11 + $0x1a0] sm:$0xff]
          %v1313 = vld [vmem:[#allocation11 + $0x1a8] sm:$0xff]
          %v1314 = vld [vmem:[#allocation11 + $0x1b0] sm:$0xff]
          %v1315 = vld [vmem:[#allocation11 + $0x1b8] sm:$0xff]
          %v1316 = vld [vmem:[#allocation11 + $0x1c0] sm:$0xff]
          %v1317 = vld [vmem:[#allocation11 + $0x1c8] sm:$0xff]
          %v1318 = vld [vmem:[#allocation11 + $0x1d0] sm:$0xff]
          %v1319 = vld [vmem:[#allocation11 + $0x1d8] sm:$0xff]
          %v1320 = vld [vmem:[#allocation11 + $0x1e0] sm:$0xff]
          %v1321 = vld [vmem:[#allocation11 + $0x1e8] sm:$0xff]
          %v1322 = vld [vmem:[#allocation11 + $0x1f0] sm:$0xff]
          %v1323 = vld [vmem:[#allocation11 + $0x1f8] sm:$0xff]
          %v1324 = vld [vmem:[%s6] sm:$0xf]
          %v1326 = vlaneseq
          %v1327 = vshrl.u32 %v1326, 7
          %v1328 = vsub.s32 0, %v1327
          %v1329 = vrot.slane %v1324, %v1328
          %v1330 = vlaneseq
          %v1331 = vshrl.u32 %v1330, 7
          %v1332 = vsub.s32 1, %v1331
          %v1333 = vrot.slane %v1324, %v1332
          %v1334 = vlaneseq
          %v1335 = vshrl.u32 %v1334, 7
          %v1336 = vsub.s32 2, %v1335
          %v1337 = vrot.slane %v1324, %v1336
          %v1338 = vlaneseq
          %v1339 = vshrl.u32 %v1338, 7
          %v1340 = vsub.s32 3, %v1339
          %v1341 = vrot.slane %v1324, %v1340
          %1346 = vmatprep.subr.mxu0 %v1321
          %1347 = vmatpush1.msra.mxu0 %v1320
          %1348 = vmatprep.subr.mxu0 %v1317
          %1349 = vmatpush1.msra.mxu0 %v1316
          %1350 = vmatprep.subr.mxu0 %v1313
          %1351 = vmatpush1.msra.mxu0 %v1312
          %1352 = vmatprep.subr.mxu0 %v1309
          %1353 = vmatpush1.msra.mxu0 %v1308
          %1354 = vmatprep.subr.mxu0 %v1305
          %1355 = vmatpush1.msra.mxu0 %v1304
          %1356 = vmatprep.subr.mxu0 %v1301
          %1357 = vmatpush1.msra.mxu0 %v1300
          %1358 = vmatprep.subr.mxu0 %v1297
          %1359 = vmatpush1.msra.mxu0 %v1296
          %1360 = vmatprep.subr.mxu0 %v1293
          %1361 = vmatpush1.msra.mxu0 %v1292
          %1362 = vmatprep.subr.mxu0 %v1289
          %1363 = vmatpush1.msra.mxu0 %v1288
          %1364 = vmatprep.subr.mxu0 %v1285
          %1365 = vmatpush1.msra.mxu0 %v1284
          %1366 = vmatprep.subr.mxu0 %v1281
          %1367 = vmatpush1.msra.mxu0 %v1280
          %1368 = vmatprep.subr.mxu0 %v1277
          %1369 = vmatpush1.msra.mxu0 %v1276
          %1370 = vmatprep.subr.mxu0 %v1273
          %1371 = vmatpush1.msra.mxu0 %v1272
          %1372 = vmatprep.subr.mxu0 %v1269
          %1373 = vmatpush1.msra.mxu0 %v1268
          %1374 = vmatprep.subr.mxu0 %v1265
          %1375 = vmatpush1.msra.mxu0 %v1264
          %1376 = vmatprep.subr.mxu0 %v1261
          %1377 = vmatpush1.msra.mxu0 %v1260
          %1378 = vmatprep.subr.mxu0 0.0
          %1379 = vmatpush2.msra.mxu0 0.0
          %1380 = vmatprep.subr.mxu0 0.0
          %1381 = vmatpush2.msra.mxu0 0.0
          %1382 = vmatprep.subr.mxu0 0.0
          %1383 = vmatpush2.msra.mxu0 0.0
          %1384 = vmatprep.subr.mxu0 0.0
          %1385 = vmatpush2.msra.mxu0 0.0
          %1386 = vmatprep.subr.mxu0 0.0
          %1387 = vmatpush2.msra.mxu0 0.0
          %1388 = vmatprep.subr.mxu0 0.0
          %1389 = vmatpush2.msra.mxu0 0.0
          %1390 = vmatprep.subr.mxu0 0.0
          %1391 = vmatpush2.msra.mxu0 0.0
          %1392 = vmatprep.subr.mxu0 0.0
          %1393 = vmatpush2.msra.mxu0 0.0
          %1394 = vmatprep.subr.mxu0 0.0
          %1395 = vmatpush2.msra.mxu0 0.0
          %1396 = vmatprep.subr.mxu0 0.0
          %1397 = vmatpush2.msra.mxu0 0.0
          %1398 = vmatprep.subr.mxu0 0.0
          %1399 = vmatpush2.msra.mxu0 0.0
          %1400 = vmatprep.subr.mxu0 0.0
          %1401 = vmatpush2.msra.mxu0 0.0
          %1402 = vmatprep.subr.mxu0 0.0
          %1403 = vmatpush2.msra.mxu0 0.0
          %1404 = vmatprep.subr.mxu0 0.0
          %1405 = vmatpush2.msra.mxu0 0.0
          %1406 = vmatprep.subr.mxu0 0.0
          %1407 = vmatpush2.msra.mxu0 0.0
          %1408 = vmatprep.subr.mxu0 0.0
          %1409 = vmatpush2.msra.mxu0 0.0
          %1410 = vmatprep.mubr.f32.mxu0 0.0
          %1411 = vmatmul.mubr.f32.gmra.mxu0 %v1259
          %v1412 = vpop.f32.mrf.mxu0
          %v1413 = vadd.f32 %v1329, %v1412
          %v1414 = vpop.f32.mrf.mxu0
          %v1415 = vadd.f32 %v1333, %v1414
          %1416 = vdwg.mxu0
          %1417 = vmatprep.subr.mxu0 %v1323
          %1418 = vmatpush1.msra.mxu0 %v1322
          %1419 = vmatprep.subr.mxu0 %v1319
          %1420 = vmatpush1.msra.mxu0 %v1318
          %1421 = vmatprep.subr.mxu0 %v1315
          %1422 = vmatpush1.msra.mxu0 %v1314
          %1423 = vmatprep.subr.mxu0 %v1311
          %1424 = vmatpush1.msra.mxu0 %v1310
          %1425 = vmatprep.subr.mxu0 %v1307
          %1426 = vmatpush1.msra.mxu0 %v1306
          %1427 = vmatprep.subr.mxu0 %v1303
          %1428 = vmatpush1.msra.mxu0 %v1302
          %1429 = vmatprep.subr.mxu0 %v1299
          %1430 = vmatpush1.msra.mxu0 %v1298
          %1431 = vmatprep.subr.mxu0 %v1295
          %1432 = vmatpush1.msra.mxu0 %v1294
          %1433 = vmatprep.subr.mxu0 %v1291
          %1434 = vmatpush1.msra.mxu0 %v1290
          %1435 = vmatprep.subr.mxu0 %v1287
          %1436 = vmatpush1.msra.mxu0 %v1286
          %1437 = vmatprep.subr.mxu0 %v1283
          %1438 = vmatpush1.msra.mxu0 %v1282
          %1439 = vmatprep.subr.mxu0 %v1279
          %1440 = vmatpush1.msra.mxu0 %v1278
          %1441 = vmatprep.subr.mxu0 %v1275
          %1442 = vmatpush1.msra.mxu0 %v1274
          %1443 = vmatprep.subr.mxu0 %v1271
          %1444 = vmatpush1.msra.mxu0 %v1270
          %1445 = vmatprep.subr.mxu0 %v1267
          %1446 = vmatpush1.msra.mxu0 %v1266
          %1447 = vmatprep.subr.mxu0 %v1263
          %1448 = vmatpush1.msra.mxu0 %v1262
          %1449 = vmatprep.subr.mxu0 0.0
          %1450 = vmatpush2.msra.mxu0 0.0
          %1451 = vmatprep.subr.mxu0 0.0
          %1452 = vmatpush2.msra.mxu0 0.0
          %1453 = vmatprep.subr.mxu0 0.0
          %1454 = vmatpush2.msra.mxu0 0.0
          %1455 = vmatprep.subr.mxu0 0.0
          %1456 = vmatpush2.msra.mxu0 0.0
          %1457 = vmatprep.subr.mxu0 0.0
          %1458 = vmatpush2.msra.mxu0 0.0
          %1459 = vmatprep.subr.mxu0 0.0
          %1460 = vmatpush2.msra.mxu0 0.0
          %1461 = vmatprep.subr.mxu0 0.0
          %1462 = vmatpush2.msra.mxu0 0.0
          %1463 = vmatprep.subr.mxu0 0.0
          %1464 = vmatpush2.msra.mxu0 0.0
          %1465 = vmatprep.subr.mxu0 0.0
          %1466 = vmatpush2.msra.mxu0 0.0
          %1467 = vmatprep.subr.mxu0 0.0
          %1468 = vmatpush2.msra.mxu0 0.0
          %1469 = vmatprep.subr.mxu0 0.0
          %1470 = vmatpush2.msra.mxu0 0.0
          %1471 = vmatprep.subr.mxu0 0.0
          %1472 = vmatpush2.msra.mxu0 0.0
          %1473 = vmatprep.subr.mxu0 0.0
          %1474 = vmatpush2.msra.mxu0 0.0
          %1475 = vmatprep.subr.mxu0 0.0
          %1476 = vmatpush2.msra.mxu0 0.0
          %1477 = vmatprep.subr.mxu0 0.0
          %1478 = vmatpush2.msra.mxu0 0.0
          %1479 = vmatprep.subr.mxu0 0.0
          %1480 = vmatpush2.msra.mxu0 0.0
          %1481 = vmatprep.mubr.f32.mxu0 0.0
          %1482 = vmatmul.mubr.f32.gmra.mxu0 %v1259
          %v1483 = vpop.f32.mrf.mxu0
          %v1484 = vadd.f32 %v1337, %v1483
          %v1485 = vpop.f32.mrf.mxu0
          %v1486 = vadd.f32 %v1341, %v1485
          %1487 = vdwg.mxu0
          %v1488 = vmax.f32 %v1413, 0.0
          %v1489 = vmax.f32 %v1415, 0.0
          %v1490 = vmax.f32 %v1484, 0.0
          %v1491 = vmax.f32 %v1486, 0.0
          %v1492 = vld [vmem:[#allocation14] sm:$0xff]
          %v1493 = vld [vmem:[#allocation14 + $0x8] sm:$0xff]
          %v1494 = vld [vmem:[#allocation14 + $0x10] sm:$0xff]
          %v1495 = vld [vmem:[#allocation14 + $0x18] sm:$0xff]
          %v1496 = vmul.f32 %v1488, %v1492
          %v1497 = vmul.f32 %v1489, %v1493
          %v1498 = vmul.f32 %v1490, %v1494
          %v1499 = vmul.f32 %v1491, %v1495
          %v1500 = vld [vmem:[#allocation12] sm:$0xff]
          %v1501 = vld [vmem:[#allocation12 + $0x8] sm:$0xff]
          %v1502 = vld [vmem:[#allocation12 + $0x10] sm:$0xff]
          %v1503 = vld [vmem:[#allocation12 + $0x18] sm:$0xff]
          %v1504 = vld [vmem:[#allocation12 + $0x20] sm:$0xff]
          %v1505 = vld [vmem:[#allocation12 + $0x28] sm:$0xff]
          %v1506 = vld [vmem:[#allocation12 + $0x30] sm:$0xff]
          %v1507 = vld [vmem:[#allocation12 + $0x38] sm:$0xff]
          %v1508 = vld [vmem:[#allocation12 + $0x40] sm:$0xff]
          %v1509 = vld [vmem:[#allocation12 + $0x48] sm:$0xff]
          %v1510 = vld [vmem:[#allocation12 + $0x50] sm:$0xff]
          %v1511 = vld [vmem:[#allocation12 + $0x58] sm:$0xff]
          %v1512 = vld [vmem:[#allocation12 + $0x60] sm:$0xff]
          %v1513 = vld [vmem:[#allocation12 + $0x68] sm:$0xff]
          %v1514 = vld [vmem:[#allocation12 + $0x70] sm:$0xff]
          %v1515 = vld [vmem:[#allocation12 + $0x78] sm:$0xff]
          %v1516 = vld [vmem:[#allocation12 + $0x80] sm:$0xff]
          %v1517 = vld [vmem:[#allocation12 + $0x88] sm:$0xff]
          %v1518 = vld [vmem:[#allocation12 + $0x90] sm:$0xff]
          %v1519 = vld [vmem:[#allocation12 + $0x98] sm:$0xff]
          %v1520 = vld [vmem:[#allocation12 + $0xa0] sm:$0xff]
          %v1521 = vld [vmem:[#allocation12 + $0xa8] sm:$0xff]
          %v1522 = vld [vmem:[#allocation12 + $0xb0] sm:$0xff]
          %v1523 = vld [vmem:[#allocation12 + $0xb8] sm:$0xff]
          %v1524 = vld [vmem:[#allocation12 + $0xc0] sm:$0xff]
          %v1525 = vld [vmem:[#allocation12 + $0xc8] sm:$0xff]
          %v1526 = vld [vmem:[#allocation12 + $0xd0] sm:$0xff]
          %v1527 = vld [vmem:[#allocation12 + $0xd8] sm:$0xff]
          %v1528 = vld [vmem:[#allocation12 + $0xe0] sm:$0xff]
          %v1529 = vld [vmem:[#allocation12 + $0xe8] sm:$0xff]
          %v1530 = vld [vmem:[#allocation12 + $0xf0] sm:$0xff]
          %v1531 = vld [vmem:[#allocation12 + $0xf8] sm:$0xff]
          %v1532 = vld [vmem:[#allocation12 + $0x100] sm:$0xff]
          %v1533 = vld [vmem:[#allocation12 + $0x108] sm:$0xff]
          %v1534 = vld [vmem:[#allocation12 + $0x110] sm:$0xff]
          %v1535 = vld [vmem:[#allocation12 + $0x118] sm:$0xff]
          %v1536 = vld [vmem:[#allocation12 + $0x120] sm:$0xff]
          %v1537 = vld [vmem:[#allocation12 + $0x128] sm:$0xff]
          %v1538 = vld [vmem:[#allocation12 + $0x130] sm:$0xff]
          %v1539 = vld [vmem:[#allocation12 + $0x138] sm:$0xff]
          %v1540 = vld [vmem:[#allocation12 + $0x140] sm:$0xff]
          %v1541 = vld [vmem:[#allocation12 + $0x148] sm:$0xff]
          %v1542 = vld [vmem:[#allocation12 + $0x150] sm:$0xff]
          %v1543 = vld [vmem:[#allocation12 + $0x158] sm:$0xff]
          %v1544 = vld [vmem:[#allocation12 + $0x160] sm:$0xff]
          %v1545 = vld [vmem:[#allocation12 + $0x168] sm:$0xff]
          %v1546 = vld [vmem:[#allocation12 + $0x170] sm:$0xff]
          %v1547 = vld [vmem:[#allocation12 + $0x178] sm:$0xff]
          %v1548 = vld [vmem:[#allocation12 + $0x180] sm:$0xff]
          %v1549 = vld [vmem:[#allocation12 + $0x188] sm:$0xff]
          %v1550 = vld [vmem:[#allocation12 + $0x190] sm:$0xff]
          %v1551 = vld [vmem:[#allocation12 + $0x198] sm:$0xff]
          %v1552 = vld [vmem:[#allocation12 + $0x1a0] sm:$0xff]
          %v1553 = vld [vmem:[#allocation12 + $0x1a8] sm:$0xff]
          %v1554 = vld [vmem:[#allocation12 + $0x1b0] sm:$0xff]
          %v1555 = vld [vmem:[#allocation12 + $0x1b8] sm:$0xff]
          %v1556 = vld [vmem:[#allocation12 + $0x1c0] sm:$0xff]
          %v1557 = vld [vmem:[#allocation12 + $0x1c8] sm:$0xff]
          %v1558 = vld [vmem:[#allocation12 + $0x1d0] sm:$0xff]
          %v1559 = vld [vmem:[#allocation12 + $0x1d8] sm:$0xff]
          %v1560 = vld [vmem:[#allocation12 + $0x1e0] sm:$0xff]
          %v1561 = vld [vmem:[#allocation12 + $0x1e8] sm:$0xff]
          %v1562 = vld [vmem:[#allocation12 + $0x1f0] sm:$0xff]
          %v1563 = vld [vmem:[#allocation12 + $0x1f8] sm:$0xff]
          %v1564 = vld [vmem:[%s8] sm:$0x1]
          %v1566 = vlaneseq
          %v1567 = vshrl.u32 %v1566, 7
          %v1568 = vsub.s32 0, %v1567
          %v1569 = vrot.slane %v1564, %v1568
          %1571 = vmatprep.subr.mxu0 0.0
          %1572 = vmatpush1.msra.mxu0 %v1515
          %1573 = vmatprep.subr.mxu0 0.0
          %1574 = vmatpush1.msra.mxu0 %v1514
          %1575 = vmatprep.subr.mxu0 0.0
          %1576 = vmatpush1.msra.mxu0 %v1513
          %1577 = vmatprep.subr.mxu0 0.0
          %1578 = vmatpush1.msra.mxu0 %v1512
          %1579 = vmatprep.subr.mxu0 0.0
          %1580 = vmatpush1.msra.mxu0 %v1511
          %1581 = vmatprep.subr.mxu0 0.0
          %1582 = vmatpush1.msra.mxu0 %v1510
          %1583 = vmatprep.subr.mxu0 0.0
          %1584 = vmatpush1.msra.mxu0 %v1509
          %1585 = vmatprep.subr.mxu0 0.0
          %1586 = vmatpush1.msra.mxu0 %v1508
          %1587 = vmatprep.subr.mxu0 0.0
          %1588 = vmatpush1.msra.mxu0 %v1507
          %1589 = vmatprep.subr.mxu0 0.0
          %1590 = vmatpush1.msra.mxu0 %v1506
          %1591 = vmatprep.subr.mxu0 0.0
          %1592 = vmatpush1.msra.mxu0 %v1505
          %1593 = vmatprep.subr.mxu0 0.0
          %1594 = vmatpush1.msra.mxu0 %v1504
          %1595 = vmatprep.subr.mxu0 0.0
          %1596 = vmatpush1.msra.mxu0 %v1503
          %1597 = vmatprep.subr.mxu0 0.0
          %1598 = vmatpush1.msra.mxu0 %v1502
          %1599 = vmatprep.subr.mxu0 0.0
          %1600 = vmatpush1.msra.mxu0 %v1501
          %1601 = vmatprep.subr.mxu0 0.0
          %1602 = vmatpush1.msra.mxu0 %v1500
          %1603 = vmatprep.subr.mxu0 0.0
          %1604 = vmatpush2.msra.mxu0 %v1531
          %1605 = vmatprep.subr.mxu0 0.0
          %1606 = vmatpush2.msra.mxu0 %v1530
          %1607 = vmatprep.subr.mxu0 0.0
          %1608 = vmatpush2.msra.mxu0 %v1529
          %1609 = vmatprep.subr.mxu0 0.0
          %1610 = vmatpush2.msra.mxu0 %v1528
          %1611 = vmatprep.subr.mxu0 0.0
          %1612 = vmatpush2.msra.mxu0 %v1527
          %1613 = vmatprep.subr.mxu0 0.0
          %1614 = vmatpush2.msra.mxu0 %v1526
          %1615 = vmatprep.subr.mxu0 0.0
          %1616 = vmatpush2.msra.mxu0 %v1525
          %1617 = vmatprep.subr.mxu0 0.0
          %1618 = vmatpush2.msra.mxu0 %v1524
          %1619 = vmatprep.subr.mxu0 0.0
          %1620 = vmatpush2.msra.mxu0 %v1523
          %1621 = vmatprep.subr.mxu0 0.0
          %1622 = vmatpush2.msra.mxu0 %v1522
          %1623 = vmatprep.subr.mxu0 0.0
          %1624 = vmatpush2.msra.mxu0 %v1521
          %1625 = vmatprep.subr.mxu0 0.0
          %1626 = vmatpush2.msra.mxu0 %v1520
          %1627 = vmatprep.subr.mxu0 0.0
          %1628 = vmatpush2.msra.mxu0 %v1519
          %1629 = vmatprep.subr.mxu0 0.0
          %1630 = vmatpush2.msra.mxu0 %v1518
          %1631 = vmatprep.subr.mxu0 0.0
          %1632 = vmatpush2.msra.mxu0 %v1517
          %1633 = vmatprep.subr.mxu0 0.0
          %1634 = vmatpush2.msra.mxu0 %v1516
          %1635 = vmatprep.mubr.f32.mxu0 %v1497
          %1636 = vmatmul.mubr.f32.gmra.mxu0 %v1496
          %v1637 = vpop.f32.mrf.mxu0
          %v1638 = vadd.f32 %v1569, %v1637
          %v1639 = vpop.f32.mrf.mxu0
          %1640 = vdwg.mxu0
          %1641 = vmatprep.subr.mxu0 0.0
          %1642 = vmatpush1.msra.mxu0 %v1547
          %1643 = vmatprep.subr.mxu0 0.0
          %1644 = vmatpush1.msra.mxu0 %v1546
          %1645 = vmatprep.subr.mxu0 0.0
          %1646 = vmatpush1.msra.mxu0 %v1545
          %1647 = vmatprep.subr.mxu0 0.0
          %1648 = vmatpush1.msra.mxu0 %v1544
          %1649 = vmatprep.subr.mxu0 0.0
          %1650 = vmatpush1.msra.mxu0 %v1543
          %1651 = vmatprep.subr.mxu0 0.0
          %1652 = vmatpush1.msra.mxu0 %v1542
          %1653 = vmatprep.subr.mxu0 0.0
          %1654 = vmatpush1.msra.mxu0 %v1541
          %1655 = vmatprep.subr.mxu0 0.0
          %1656 = vmatpush1.msra.mxu0 %v1540
          %1657 = vmatprep.subr.mxu0 0.0
          %1658 = vmatpush1.msra.mxu0 %v1539
          %1659 = vmatprep.subr.mxu0 0.0
          %1660 = vmatpush1.msra.mxu0 %v1538
          %1661 = vmatprep.subr.mxu0 0.0
          %1662 = vmatpush1.msra.mxu0 %v1537
          %1663 = vmatprep.subr.mxu0 0.0
          %1664 = vmatpush1.msra.mxu0 %v1536
          %1665 = vmatprep.subr.mxu0 0.0
          %1666 = vmatpush1.msra.mxu0 %v1535
          %1667 = vmatprep.subr.mxu0 0.0
          %1668 = vmatpush1.msra.mxu0 %v1534
          %1669 = vmatprep.subr.mxu0 0.0
          %1670 = vmatpush1.msra.mxu0 %v1533
          %1671 = vmatprep.subr.mxu0 0.0
          %1672 = vmatpush1.msra.mxu0 %v1532
          %1673 = vmatprep.subr.mxu0 0.0
          %1674 = vmatpush2.msra.mxu0 %v1563
          %1675 = vmatprep.subr.mxu0 0.0
          %1676 = vmatpush2.msra.mxu0 %v1562
          %1677 = vmatprep.subr.mxu0 0.0
          %1678 = vmatpush2.msra.mxu0 %v1561
          %1679 = vmatprep.subr.mxu0 0.0
          %1680 = vmatpush2.msra.mxu0 %v1560
          %1681 = vmatprep.subr.mxu0 0.0
          %1682 = vmatpush2.msra.mxu0 %v1559
          %1683 = vmatprep.subr.mxu0 0.0
          %1684 = vmatpush2.msra.mxu0 %v1558
          %1685 = vmatprep.subr.mxu0 0.0
          %1686 = vmatpush2.msra.mxu0 %v1557
          %1687 = vmatprep.subr.mxu0 0.0
          %1688 = vmatpush2.msra.mxu0 %v1556
          %1689 = vmatprep.subr.mxu0 0.0
          %1690 = vmatpush2.msra.mxu0 %v1555
          %1691 = vmatprep.subr.mxu0 0.0
          %1692 = vmatpush2.msra.mxu0 %v1554
          %1693 = vmatprep.subr.mxu0 0.0
          %1694 = vmatpush2.msra.mxu0 %v1553
          %1695 = vmatprep.subr.mxu0 0.0
          %1696 = vmatpush2.msra.mxu0 %v1552
          %1697 = vmatprep.subr.mxu0 0.0
          %1698 = vmatpush2.msra.mxu0 %v1551
          %1699 = vmatprep.subr.mxu0 0.0
          %1700 = vmatpush2.msra.mxu0 %v1550
          %1701 = vmatprep.subr.mxu0 0.0
          %1702 = vmatpush2.msra.mxu0 %v1549
          %1703 = vmatprep.subr.mxu0 0.0
          %1704 = vmatpush2.msra.mxu0 %v1548
          %1705 = vmatprep.mubr.f32.mxu0 %v1499
          %1706 = vmatmul.mubr.f32.gmra.mxu0 %v1498
          %v1707 = vpop.f32.mrf.mxu0
          %v1708 = vadd.f32 %v1638, %v1707
          %v1709 = vpop.f32.mrf.mxu0
          %1710 = vdwg.mxu0
          %1711 = vst [vmem:[#allocation15] sm:$0xff] %v1708
        $region96: #{tpu_custom_call.1} parent=59 // pred_fallthru
          _
        // Predicated region
        $region97: #{tpu_custom_call.1} parent=59 // pred_check
          %p1712 = pneg %p285
        $region98: #{tpu_custom_call.1} parent=59 // pred_check_branch
          %1714 = sbr.rel (%p1712) target = $region100
        $region99: #{tpu_custom_call.1} parent=59 // pred_region
          %s1716 = ssub.s32 128, 128
          %1717 = vsyncadd [#allocation5], %s1716
          %s1718 = smul.addr %s32, 128
          %s1719 = scalar_lea.hbm %s10, %s1718
          %s1721 = sshll.u32 [#allocation15], 4
          %s1722 = int_to_ptr.vmem [resolvable:$true] %s1721
          %1724 = dma.vmem_to_hbm [thread:$0]  %s1722, 128, %s1719, [#allocation5]
        $region100: #{tpu_custom_call.1} parent=59 // pred_fallthru
          _
        // Predicated region
        $region101: #{tpu_custom_call.1} parent=59 // pred_check
          %p1725 = pneg %p285
        $region102: #{tpu_custom_call.1} parent=59 // pred_check_branch
          %1727 = sbr.rel (%p1725) target = $region104
        $region103: #{tpu_custom_call.1} parent=59 // pred_region
          %1728 = dma.done [#allocation5], 128
        $region104: #{tpu_custom_call.1} parent=59 // pred_fallthru
          _
      $region60: #{tpu_custom_call.1} parent=5 // pred_fallthru
        _
      %p1729 = scmp.le.s32.totalorder 2, %s23
      // Predicated region
      $region105: #{tpu_custom_call.1} parent=5 // pred_check
        %p1730 = pneg %p1729
      $region106: #{tpu_custom_call.1} parent=5 // pred_check_branch
        %1732 = sbr.rel (%p1730) target = $region108
      $region107: #{tpu_custom_call.1} parent=5 // pred_region
        %s1733 = ssub.s32 %s23, 2
      $region108: #{tpu_custom_call.1} parent=5 // pred_fallthru
        _
    $region6: #{tpu_custom_call.1} parent=1 // loop_footer
      %s27 = sadd.s32 1, %s23
    $region7: #{tpu_custom_call.1} parent=1 // loop_footer_branch
      %22 = sbr.rel target = $region3
    $region8: #{tpu_custom_call.1} parent=1 // loop_exit
      _
    %1734 = vsyncpa [#allocation4], 1
    %s1735 = scalar_lea.sflag [#allocation4], 1
    %1736 = vsyncpa %s1735, 1
    %1737 = vsyncpa [#allocation7], 1
    %1738 = vsyncpa [#allocation10], 1
    %1739 = vsyncpa [#allocation13], 1
    %1740 = vsyncpa [#allocation5], 1
    %s1741 = scalar_lea.sflag [#allocation5], 1
    %1742 = vsyncpa %s1741, 1

</llo_original>
